<compile_context>
chip_gen: v7x
topology: tpu7x:2x2x1
jax: 0.10.0
libtpu: 0.0.40
codegen_flags: <defaults>
</compile_context>

<pallas_src>
import jax
import jax.numpy as jnp
from jax.experimental import pallas as pl
from jax.experimental.pallas import tpu as pltpu

# probs output dtype (perf: bf16 halves the probs HBM writeback).  Use
# jnp.float32 here if exactly-normalized f32 probabilities are required.
PROBS_DTYPE = jnp.bfloat16
_PROBS_ITEMSIZE = jnp.dtype(PROBS_DTYPE).itemsize
_VMEM_HEADROOM = 4 << 20  # slack for semaphores / compiler-internal scratch


# ---------------------------------------------------------------------------
# Kernel
# ---------------------------------------------------------------------------
def _kernel(lhs_ref, wconv_ref, wfc_ref, bias_ref, logits_ref, probs_ref):
    # lhs_ref:   (Mt, 3E) bf16 — Mt = Bt*s_dec rows of [x_{t-1} | x_t | x_{t+1}]
    # wconv_ref: (3E, C)  bf16
    # wfc_ref:   (C, V)   bf16
    # bias_ref:  (1, V)   f32  (= b_conv @ w_fc.T + b_fc, folded in the wrapper)
    # Fused conv: ONE K=3E MXU matmul, f32 accumulation (conv bias folded away).
    conv = jnp.dot(lhs_ref[...], wconv_ref[...],
                   preferred_element_type=jnp.float32)

    # fc: Linear(C -> V); bf16 operands, f32 accumulation, fused f32 bias.
    logits = jnp.dot(conv.astype(jnp.bfloat16), wfc_ref[...],
                     preferred_element_type=jnp.float32) + bias_ref[...]
    logits_ref[...] = logits.astype(logits_ref.dtype)

    # Softmax over vocab in f32.  approx reciprocal runs on the EUP slot; its
    # ~1e-4 relative error is far below the bf16 probs quantization error.
    m = jnp.max(logits, axis=-1, keepdims=True)
    e = jnp.exp(logits - m)
    denom = jnp.sum(e, axis=-1, keepdims=True)
    probs_ref[...] = (e * pl.reciprocal(denom, approx=True)).astype(probs_ref.dtype)


# ---------------------------------------------------------------------------
# Parameters (synthetic, matching the nn.Module shapes)
# ---------------------------------------------------------------------------
def init_params(key, vocab_size, embedding_dim, cnn_out_channels,
                cnn_kernel_size=3, pad_token_id=0):
    ks = jax.random.split(key, 7)
    emb = 0.02 * jax.random.normal(ks[0], (vocab_size, embedding_dim), jnp.float32)
    emb = emb.at[pad_token_id].set(0.0)                       # padding_idx=0
    prev_emb = 0.02 * jax.random.normal(ks[1], (1, embedding_dim), jnp.float32)
    sep_emb = 0.02 * jax.random.normal(ks[2], (1, embedding_dim), jnp.float32)
    # Conv1d weight: (C_out, C_in, K)   bias: (C_out,)
    w_conv = 0.02 * jax.random.normal(
        ks[3], (cnn_out_channels, embedding_dim, cnn_kernel_size), jnp.float32)
    b_conv = 0.02 * jax.random.normal(ks[4], (cnn_out_channels,), jnp.float32)
    # Linear weight: (V, C)   bias: (V,)
    w_fc = 0.02 * jax.random.normal(ks[5], (vocab_size, cnn_out_channels), jnp.float32)
    b_fc = 0.02 * jax.random.normal(ks[6], (vocab_size,), jnp.float32)
    return dict(embedding=emb, prev_embedding=prev_emb, sep_embedding=sep_emb,
                w_conv=w_conv, b_conv=b_conv, w_fc=w_fc, b_fc=b_fc)


# ---------------------------------------------------------------------------
# Chip-aware tiling helpers
# ---------------------------------------------------------------------------
def _tpu_topology():
    """(tensorcores_per_chip, vmem_capacity_bytes) with conservative fallbacks."""
    cores, vmem_cap = 1, 64 << 20            # v7x has the smallest VMEM (64 MiB)
    try:
        info = pltpu.get_tpu_info()
        for attr in ("num_cores", "core_count", "tensorcores_per_chip",
                     "num_tensorcores"):
            v = getattr(info, attr, None)
            if isinstance(v, int) and v > 0:
                cores = v
                break
        v = getattr(info, "vmem_capacity_bytes", None)
        if isinstance(v, int) and v > 0:
            vmem_cap = v
    except Exception:
        pass
    if cores == 1:
        try:
            kind = jax.devices()[0].device_kind.lower()
            # v4 / v5p (megacore) and v7x expose 2 TensorCores per chip;
            # v5e / v6e have a single TensorCore.
            if any(t in kind for t in ("v4", "v5p", "v7")):
                cores = 2
        except Exception:
            pass
    return cores, vmem_cap


def _step_vmem_bytes(mt, E, C, V):
    """VMEM bytes for one grid step (double-buffered I/O, single-buffered weights)."""
    lhs = mt * 3 * E * 2 * 2                          # bf16 LHS, 2 buffers
    outs = mt * V * (4 + _PROBS_ITEMSIZE) * 2         # f32 logits + probs, 2 buffers
    wgt = (3 * E * C + C * V) * 2                     # bf16 weights, Buffered(1)
    bias = V * 4                                      # fused f32 bias
    return lhs + outs + wgt + bias


def _choose_batch_block(B, s_dec, E, C, V, num_cores, vmem_budget_bytes):
    """Largest divisor of B whose grid step fits the VMEM budget.

    On single-TC chips (v5e/v6e) this yields one big step (Mt = B*s_dec).  On
    multi-TC chips (v7x) it prefers >= num_cores balanced "parallel" steps, each
    as large as the budget allows.  bf16 LHS tiles must be 16-row aligned unless
    we fall back to the always-legal full-extent block."""
    divisors = [d for d in range(1, B + 1) if B % d == 0]
    fitting = [d for d in divisors
               if _step_vmem_bytes(d * s_dec, E, C, V) <= vmem_budget_bytes] or [1]
    bt = max(fitting)
    if num_cores > 1 and bt == B and B >= num_cores:
        per_core = [d for d in fitting if d <= B // num_cores]
        if per_core:
            bt = max(per_core)
    if bt != B and (bt * s_dec) % 16 != 0:
        bt = B
    return bt


def _const_block_spec(shape):
    """BlockSpec for a constant-index operand: request single buffering (the
    block index never changes), reclaiming VMEM headroom (matters on v7x).
    Falls back to default buffering if this Pallas version lacks pipeline_mode."""
    idx = lambda i: (0,) * len(shape)
    try:
        return pl.BlockSpec(shape, idx, pipeline_mode=pl.Buffered(1))
    except TypeError:
        return pl.BlockSpec(shape, idx)


# ---------------------------------------------------------------------------
# Wrapper
# ---------------------------------------------------------------------------
@jax.jit
def cnn_text_summarization_forward(input_ids, decoder_input_ids, params):
    """Reproduces CNNTextSummarizationModel.forward (return_dict=True).
    probs are returned in PROBS_DTYPE (bf16 by default; see module docstring)."""
    B, s_in = input_ids.shape
    _, s_dec = decoder_input_ids.shape
    emb = params["embedding"]
    E = emb.shape[1]
    C = params["w_conv"].shape[0]
    V = params["w_fc"].shape[0]

    # ---- glue (plain JAX): only the (s_dec + 2)-row decoder window is needed.
    # combined = [prev | input | sep | decoder]; the conv outputs kept by the
    # slice [:, s_in+1:-1] only read combined rows s_in .. s_in+s_dec+1, i.e.
    # [last input token (or prev if s_in == 0), sep, decoder tokens].
    if s_in > 0:
        ctx_last = emb[input_ids[:, -1]][:, None, :]                  # (B, 1, E)
    else:
        ctx_last = jnp.broadcast_to(params["prev_embedding"][None], (B, 1, E))
    sep_e = jnp.broadcast_to(params["sep_embedding"][None], (B, 1, E))
    dec_emb = emb[decoder_input_ids]                                  # (B, s_dec, E)
    window = jnp.concatenate([ctx_last, sep_e, dec_emb], axis=1)      # (B, s_dec+2, E)

    # Fused conv LHS: output row j uses window rows j, j+1, j+2 -> (B*s_dec, 3E).
    # TODO(synk): once E/s_dec grow enough that the 3x LHS read traffic matters,
    # feed the (bt, s_dec+2, E) window block and build the shifted views in VMEM.
    lhs = jnp.concatenate(
        [window[:, 0:s_dec], window[:, 1:s_dec + 1], window[:, 2:s_dec + 2]],
        axis=-1).reshape(B * s_dec, 3 * E).astype(jnp.bfloat16)

    # Conv weight (C, E, K) -> (K, E, C) -> (3E, C): conv = lhs @ w_conv_f.
    w_conv_f = jnp.transpose(params["w_conv"], (2, 1, 0)).reshape(3 * E, C)
    w_conv_f = w_conv_f.astype(jnp.bfloat16)
    # TODO(synk): on v7x at realistic V, store w_fc as fp8 (e4m3) and use the
    # MXU's bf16 x fp8 path to halve the dominant fc-weight DMA / VMEM footprint.
    w_fc = params["w_fc"].T.astype(jnp.bfloat16)                      # (C, V)
    # Fold the conv bias into the fc bias: logits = (lhs@w_conv_f)@w_fc + bias.
    bias_fused = (params["b_conv"] @ params["w_fc"].T
                  + params["b_fc"]).reshape(1, V).astype(jnp.float32)

    num_cores, vmem_cap = _tpu_topology()
    vmem_budget = min(vmem_cap, 96 << 20) // 2 - _VMEM_HEADROOM
    bt = _choose_batch_block(B, s_dec, E, C, V, num_cores, vmem_budget)
    mt = bt * s_dec
    grid = (B // bt,)
    vmem_limit = int(max(_step_vmem_bytes(mt, E, C, V) + _VMEM_HEADROOM, 16 << 20))

    # TODO(synk): for realistic vocab sizes (V >> 256) add a second grid axis
    # over V with lane-dense (C, Vt) fc-weight tiles (reduction axis last,
    # "arbitrary") and a two-pass / online softmax with m/l VMEM scratch.
    logits, probs = pl.pallas_call(
        _kernel,
        out_shape=(jax.ShapeDtypeStruct((B * s_dec, V), jnp.float32),
                   jax.ShapeDtypeStruct((B * s_dec, V), PROBS_DTYPE)),
        grid_spec=pltpu.PrefetchScalarGridSpec(
            num_scalar_prefetch=0,
            grid=grid,
            in_specs=[
                pl.BlockSpec((mt, 3 * E), lambda i: (i, 0)),   # fused conv LHS
                _const_block_spec((3 * E, C)),                 # conv weight (3E, C)
                _const_block_spec((C, V)),                     # fc weight   (C, V)
                _const_block_spec((1, V)),                     # fused bias  (1, V)
            ],
            out_specs=[
                pl.BlockSpec((mt, V), lambda i: (i, 0)),       # logits (f32)
                pl.BlockSpec((mt, V), lambda i: (i, 0)),       # probs (bf16)
            ],
        ),
        compiler_params=pltpu.CompilerParams(
            dimension_semantics=("parallel",),
            vmem_limit_bytes=vmem_limit),
    )(lhs, w_conv_f, w_fc, bias_fused)

    return {"logits": logits.reshape(B, s_dec, V),
            "probs": probs.reshape(B, s_dec, V)}


# ---------------------------------------------------------------------------
# Pure-JAX reference (f32), mirrors the PyTorch forward, for validation
# ---------------------------------------------------------------------------
def _reference_forward(input_ids, decoder_input_ids, params):
    B, s_in = input_ids.shape
    _, s_dec = decoder_input_ids.shape
    emb = params["embedding"]
    E = emb.shape[1]
    input_emb = emb[input_ids]
    dec_emb = emb[decoder_input_ids]
    prev_e = jnp.broadcast_to(params["prev_embedding"][None], (B, 1, E))
    sep_e = jnp.broadcast_to(params["sep_embedding"][None], (B, 1, E))
    combined = jnp.concatenate([prev_e, input_emb, sep_e, dec_emb], axis=1)  # (B, L, E)
    x_ncl = jnp.transpose(combined, (0, 2, 1))               # (B, E, L), NCL like PyTorch
    conv = jax.lax.conv_general_dilated(
        x_ncl, params["w_conv"], window_strides=(1,), padding=((1, 1),),
        dimension_numbers=("NCH", "OIH", "NCH"))
    conv = conv + params["b_conv"][None, :, None]
    conv = jnp.transpose(conv, (0, 2, 1))                    # (B, L, C)
    conv = conv[:, s_in + 1:-1]                              # (B, s_dec, C)
    logits = conv @ params["w_fc"].T + params["b_fc"]
    probs = jax.nn.softmax(logits, axis=-1)
    return logits, probs


if __name__ == "__main__":
    # Small, module-consistent shapes: total M = B*s_dec = 256 rows
    # (one 256-row step on v5e/v6e, two 128-row parallel steps on v7x).
    VOCAB = 256
    EMB_DIM = 128
    CNN_OUT = 128
    B, S_IN, S_DEC = 16, 14, 16

    key = jax.random.PRNGKey(0)
    pkey, ikey, dkey = jax.random.split(key, 3)
    params = init_params(pkey, VOCAB, EMB_DIM, CNN_OUT)

    input_ids = jax.random.randint(ikey, (B, S_IN), 0, VOCAB, dtype=jnp.int32)
    decoder_input_ids = jax.random.randint(dkey, (B, S_DEC), 0, VOCAB, dtype=jnp.int32)

    out = cnn_text_summarization_forward(input_ids, decoder_input_ids, params)
    jax.block_until_ready(out)

    # Sanity check against a pure-f32 JAX reference (bf16 matmul operands and
    # bf16 probs output in the kernel -> relaxed tolerances).
    ref_logits, ref_probs = _reference_forward(input_ids, decoder_input_ids, params)
    assert out["logits"].shape == (B, S_DEC, VOCAB)
    assert out["probs"].shape == (B, S_DEC, VOCAB)
    assert out["logits"].dtype == jnp.float32
    assert out["probs"].dtype == PROBS_DTYPE
    assert jnp.allclose(out["logits"], ref_logits, atol=1e-3, rtol=1e-2)
    assert jnp.allclose(out["probs"].astype(jnp.float32), ref_probs,
                        atol=5e-4, rtol=2e-2)

    print("KERNEL_OK")
</pallas_src>

<mosaic_0001>
module attributes {stable_mosaic.version = 11 : i64} {
  func.func @_kernel(%arg0: i32, %arg1: memref<256x384xbf16, #tpu.memory_space<vmem>>, %arg2: memref<384x128xbf16, #tpu.memory_space<vmem>>, %arg3: memref<128x256xbf16, #tpu.memory_space<vmem>>, %arg4: memref<1x256xf32, #tpu.memory_space<vmem>>, %arg5: memref<256x256xf32, #tpu.memory_space<vmem>>, %arg6: memref<256x256xbf16, #tpu.memory_space<vmem>>) attributes {dimension_semantics = [#tpu.dimension_semantics<parallel>], iteration_bounds = array<i64: 1>, scalar_prefetch = 0 : i64, scratch_operands = 0 : i64, tpu.core_type = #tpu.core_type<tc>, window_params = [{transform_indices = @transform_0, window_bounds = array<i64: 256, 384>}, {pipeline_mode = #tpu.pipeline_mode<synchronous>, transform_indices = @transform_1, window_bounds = array<i64: 384, 128>}, {pipeline_mode = #tpu.pipeline_mode<synchronous>, transform_indices = @transform_2, window_bounds = array<i64: 128, 256>}, {pipeline_mode = #tpu.pipeline_mode<synchronous>, transform_indices = @transform_3, window_bounds = array<i64: 1, 256>}, {transform_indices = @transform_4, window_bounds = array<i64: 256, 256>}, {transform_indices = @transform_5, window_bounds = array<i64: 256, 256>}]} {
    %c0 = arith.constant 0 : index
    %c0_0 = arith.constant 0 : index
    %0 = vector.load %arg1[%c0, %c0_0] : memref<256x384xbf16, #tpu.memory_space<vmem>>, vector<256x384xbf16>
    %c0_1 = arith.constant 0 : index
    %c0_2 = arith.constant 0 : index
    %1 = vector.load %arg2[%c0_1, %c0_2] : memref<384x128xbf16, #tpu.memory_space<vmem>>, vector<384x128xbf16>
    %cst = arith.constant dense<0.000000e+00> : vector<256x128xf32>
    %2 = tpu.matmul %0, %1, %cst {dimension_numbers = #tpu.dot_dimension_numbers<[1], [0], [0], [1], [0, 0, 1, 1], [], []>} : vector<256x384xbf16>, vector<384x128xbf16>, vector<256x128xf32> -> vector<256x128xf32>
    %3 = arith.truncf %2 : vector<256x128xf32> to vector<256x128xbf16>
    %c0_3 = arith.constant 0 : index
    %c0_4 = arith.constant 0 : index
    %4 = vector.load %arg3[%c0_3, %c0_4] : memref<128x256xbf16, #tpu.memory_space<vmem>>, vector<128x256xbf16>
    %cst_5 = arith.constant dense<0.000000e+00> : vector<256x256xf32>
    %5 = tpu.matmul %3, %4, %cst_5 {dimension_numbers = #tpu.dot_dimension_numbers<[1], [0], [0], [1], [0, 0, 1, 1], [], []>} : vector<256x128xbf16>, vector<128x256xbf16>, vector<256x256xf32> -> vector<256x256xf32>
    %c0_6 = arith.constant 0 : index
    %c0_7 = arith.constant 0 : index
    %6 = vector.load %arg4[%c0_6, %c0_7] : memref<1x256xf32, #tpu.memory_space<vmem>>, vector<1x256xf32>
    %7 = vector.broadcast %6 : vector<1x256xf32> to vector<256x256xf32>
    %8 = arith.addf %5, %7 : vector<256x256xf32>
    %c0_8 = arith.constant 0 : index
    %c0_9 = arith.constant 0 : index
    %9 = vector.load %arg5[%c0_8, %c0_9] : memref<256x256xf32, #tpu.memory_space<vmem>>, vector<256x256xf32>
    tpu.vector_store %arg5[%c0_8, %c0_9], %8 {strides = array<i32>} : memref<256x256xf32, #tpu.memory_space<vmem>>, vector<256x256xf32>,
    %cst_10 = arith.constant dense<0xFF800000> : vector<256xf32>
    %10 = vector.multi_reduction <maximumf>, %8, %cst_10 [1] : vector<256x256xf32> to vector<256xf32>
    %11 = vector.shape_cast %10 : vector<256xf32> to vector<256x1xf32>
    %12 = vector.broadcast %11 : vector<256x1xf32> to vector<256x256xf32>
    %13 = arith.subf %8, %12 : vector<256x256xf32>
    %14 = math.exp %13 : vector<256x256xf32>
    %cst_11 = arith.constant dense<0.000000e+00> : vector<256xf32>
    %15 = vector.multi_reduction <add>, %14, %cst_11 [1] : vector<256x256xf32> to vector<256xf32>
    %16 = vector.shape_cast %15 : vector<256xf32> to vector<256x1xf32>
    %17 = tpu.reciprocal %16 {approx = true} : vector<256x1xf32> -> vector<256x1xf32>
    %18 = vector.broadcast %17 : vector<256x1xf32> to vector<256x256xf32>
    %19 = arith.mulf %14, %18 : vector<256x256xf32>
    %20 = arith.truncf %19 : vector<256x256xf32> to vector<256x256xbf16>
    %c0_12 = arith.constant 0 : index
    %c0_13 = arith.constant 0 : index
    %21 = vector.load %arg6[%c0_12, %c0_13] : memref<256x256xbf16, #tpu.memory_space<vmem>>, vector<256x256xbf16>
    tpu.vector_store %arg6[%c0_12, %c0_13], %20 {strides = array<i32>} : memref<256x256xbf16, #tpu.memory_space<vmem>>, vector<256x256xbf16>,
    return
  }
  func.func @transform_0(%arg0: i32) -> (i32, i32) {
    %c0_i32 = arith.constant 0 : i32
    %c0_i32_0 = arith.constant 0 : i32
    return %arg0, %c0_i32 : i32, i32
  }
  func.func @transform_1(%arg0: i32) -> (i32, i32) {
    %c0_i32 = arith.constant 0 : i32
    %c0_i32_0 = arith.constant 0 : i32
    %c0_i32_1 = arith.constant 0 : i32
    return %c0_i32, %c0_i32_0 : i32, i32
  }
  func.func @transform_2(%arg0: i32) -> (i32, i32) {
    %c0_i32 = arith.constant 0 : i32
    %c0_i32_0 = arith.constant 0 : i32
    %c0_i32_1 = arith.constant 0 : i32
    return %c0_i32, %c0_i32_0 : i32, i32
  }
  func.func @transform_3(%arg0: i32) -> (i32, i32) {
    %c0_i32 = arith.constant 0 : i32
    %c0_i32_0 = arith.constant 0 : i32
    %c0_i32_1 = arith.constant 0 : i32
    return %c0_i32, %c0_i32_0 : i32, i32
  }
  func.func @transform_4(%arg0: i32) -> (i32, i32) {
    %c0_i32 = arith.constant 0 : i32
    %c0_i32_0 = arith.constant 0 : i32
    return %arg0, %c0_i32 : i32, i32
  }
  func.func @transform_5(%arg0: i32) -> (i32, i32) {
    %c0_i32 = arith.constant 0 : i32
    %c0_i32_0 = arith.constant 0 : i32
    return %arg0, %c0_i32 : i32, i32
  }
}

</mosaic_0001>

<llo_original>
// kernel: cnn_text_summarization_forward.1
$region0: #{cnn_text_summarization_forward.1}
  #allocation0 [shape = 'u32[]', space=smem, size = 0x4, offset = 0x4, fixed_abs, tag = 'smem constant byte address 0x4 - core index']
  #allocation1 [shape = 'u32[144,128]{1,0:T(1,128)}', space=vmem, size = 0x12000, scoped, tag = 'internal scratch']
  %s0 = inlined_call_operand.vmem [shape: bf16[256,384], index: 0, kind: input, shape index: {}]
  %s1 = inlined_call_operand.vmem [shape: bf16[384,128], index: 1, kind: input, shape index: {}]
  %s2 = inlined_call_operand.vmem [shape: bf16[128,256], index: 2, kind: input, shape index: {}]
  %s3 = inlined_call_operand.vmem [shape: f32[1,256], index: 3, kind: input, shape index: {}]
  %s4 = inlined_call_operand.hbm [shape: f32[256,256], index: 4, kind: output, shape index: {0}]
  %s5 = inlined_call_operand.hbm [shape: bf16[256,256], index: 5, kind: output, shape index: {1}]
  %6 = xla_tuple %s4, %s5
  %s7 = sld [smem:[#allocation0]]
  $region34: #{cnn_text_summarization_forward.1} parent=0
    _
  %s9 = ssub.s32 1, %s7
  %s10 = scalar_select 0, %s9, %s7
  $region1: #{cnn_text_summarization_forward.1} parent=0
    #allocation2 [shape = 'u8[262144]{0}', space=vmem, size = 0x40000, scoped, tag = 'output window, operand 0, single buffered']
    #allocation3 [shape = 's32[1]{0}', space=sflag, size = 0x4, scoped, tag = 'scoped memory for cnn_text_summarization_forward.1']
    #allocation4 [shape = 'u8[131072]{0}', space=vmem, size = 0x20000, scoped, tag = 'output window, operand 1, single buffered']
    #allocation5 [shape = 's32[1]{0}', space=sflag, size = 0x4, scoped, tag = 'scoped memory for cnn_text_summarization_forward.1']
    %11 = vsyncpa [#allocation3], 0
    %12 = vsyncpa [#allocation5], 0
    // Predicated region
    $region2: #{cnn_text_summarization_forward.1} parent=1 // pred_check
      _
    $region3: #{cnn_text_summarization_forward.1} parent=1 // pred_check_branch
      %14 = sbr.rel (0) target = $region5
    $region4: #{cnn_text_summarization_forward.1} parent=1 // pred_region
      _
    $region5: #{cnn_text_summarization_forward.1} parent=1 // pred_fallthru
      _
    // Predicated region
    $region6: #{cnn_text_summarization_forward.1} parent=1 // pred_check
      _
    $region7: #{cnn_text_summarization_forward.1} parent=1 // pred_check_branch
      %16 = sbr.rel (0) target = $region9
    $region8: #{cnn_text_summarization_forward.1} parent=1 // pred_region
      _
    $region9: #{cnn_text_summarization_forward.1} parent=1 // pred_fallthru
      _
    // Predicated region
    $region10: #{cnn_text_summarization_forward.1} parent=1 // pred_check
      _
    $region11: #{cnn_text_summarization_forward.1} parent=1 // pred_check_branch
      %18 = sbr.rel (0) target = $region13
    $region12: #{cnn_text_summarization_forward.1} parent=1 // pred_region
      _
    $region13: #{cnn_text_summarization_forward.1} parent=1 // pred_fallthru
      _
    // Predicated region
    $region14: #{cnn_text_summarization_forward.1} parent=1 // pred_check
      _
    $region15: #{cnn_text_summarization_forward.1} parent=1 // pred_check_branch
      %20 = sbr.rel (0) target = $region17
    $region16: #{cnn_text_summarization_forward.1} parent=1 // pred_region
      _
    $region17: #{cnn_text_summarization_forward.1} parent=1 // pred_fallthru
      _
    %v22 = vld [vmem:[%s0] sm:$0xff]
    %v23 = vld [vmem:[%s0 + $0x8] sm:$0xf]
    %v24 = vld [vmem:[%s0 + $0xc] sm:$0xff]
    %v25 = vld [vmem:[%s0 + $0x14] sm:$0xf]
    %v26 = vld [vmem:[%s0 + $0x18] sm:$0xff]
    %v27 = vld [vmem:[%s0 + $0x20] sm:$0xf]
    %v28 = vld [vmem:[%s0 + $0x24] sm:$0xff]
    %v29 = vld [vmem:[%s0 + $0x2c] sm:$0xf]
    %v30 = vld [vmem:[%s0 + $0x30] sm:$0xff]
    %v31 = vld [vmem:[%s0 + $0x38] sm:$0xf]
    %v32 = vld [vmem:[%s0 + $0x3c] sm:$0xff]
    %v33 = vld [vmem:[%s0 + $0x44] sm:$0xf]
    %v34 = vld [vmem:[%s0 + $0x48] sm:$0xff]
    %v35 = vld [vmem:[%s0 + $0x50] sm:$0xf]
    %v36 = vld [vmem:[%s0 + $0x54] sm:$0xff]
    %v37 = vld [vmem:[%s0 + $0x5c] sm:$0xf]
    %v38 = vld [vmem:[%s0 + $0x60] sm:$0xff]
    %v39 = vld [vmem:[%s0 + $0x68] sm:$0xf]
    %v40 = vld [vmem:[%s0 + $0x6c] sm:$0xff]
    %v41 = vld [vmem:[%s0 + $0x74] sm:$0xf]
    %v42 = vld [vmem:[%s0 + $0x78] sm:$0xff]
    %v43 = vld [vmem:[%s0 + $0x80] sm:$0xf]
    %v44 = vld [vmem:[%s0 + $0x84] sm:$0xff]
    %v45 = vld [vmem:[%s0 + $0x8c] sm:$0xf]
    %v46 = vld [vmem:[%s0 + $0x90] sm:$0xff]
    %v47 = vld [vmem:[%s0 + $0x98] sm:$0xf]
    %v48 = vld [vmem:[%s0 + $0x9c] sm:$0xff]
    %v49 = vld [vmem:[%s0 + $0xa4] sm:$0xf]
    %v50 = vld [vmem:[%s0 + $0xa8] sm:$0xff]
    %v51 = vld [vmem:[%s0 + $0xb0] sm:$0xf]
    %v52 = vld [vmem:[%s0 + $0xb4] sm:$0xff]
    %v53 = vld [vmem:[%s0 + $0xbc] sm:$0xf]
    %v54 = vld [vmem:[%s0 + $0xc0] sm:$0xff]
    %v55 = vld [vmem:[%s0 + $0xc8] sm:$0xf]
    %v56 = vld [vmem:[%s0 + $0xcc] sm:$0xff]
    %v57 = vld [vmem:[%s0 + $0xd4] sm:$0xf]
    %v58 = vld [vmem:[%s0 + $0xd8] sm:$0xff]
    %v59 = vld [vmem:[%s0 + $0xe0] sm:$0xf]
    %v60 = vld [vmem:[%s0 + $0xe4] sm:$0xff]
    %v61 = vld [vmem:[%s0 + $0xec] sm:$0xf]
    %v62 = vld [vmem:[%s0 + $0xf0] sm:$0xff]
    %v63 = vld [vmem:[%s0 + $0xf8] sm:$0xf]
    %v64 = vld [vmem:[%s0 + $0xfc] sm:$0xff]
    %v65 = vld [vmem:[%s0 + $0x104] sm:$0xf]
    %v66 = vld [vmem:[%s0 + $0x108] sm:$0xff]
    %v67 = vld [vmem:[%s0 + $0x110] sm:$0xf]
    %v68 = vld [vmem:[%s0 + $0x114] sm:$0xff]
    %v69 = vld [vmem:[%s0 + $0x11c] sm:$0xf]
    %v70 = vld [vmem:[%s0 + $0x120] sm:$0xff]
    %v71 = vld [vmem:[%s0 + $0x128] sm:$0xf]
    %v72 = vld [vmem:[%s0 + $0x12c] sm:$0xff]
    %v73 = vld [vmem:[%s0 + $0x134] sm:$0xf]
    %v74 = vld [vmem:[%s0 + $0x138] sm:$0xff]
    %v75 = vld [vmem:[%s0 + $0x140] sm:$0xf]
    %v76 = vld [vmem:[%s0 + $0x144] sm:$0xff]
    %v77 = vld [vmem:[%s0 + $0x14c] sm:$0xf]
    %v78 = vld [vmem:[%s0 + $0x150] sm:$0xff]
    %v79 = vld [vmem:[%s0 + $0x158] sm:$0xf]
    %v80 = vld [vmem:[%s0 + $0x15c] sm:$0xff]
    %v81 = vld [vmem:[%s0 + $0x164] sm:$0xf]
    %v82 = vld [vmem:[%s0 + $0x168] sm:$0xff]
    %v83 = vld [vmem:[%s0 + $0x170] sm:$0xf]
    %v84 = vld [vmem:[%s0 + $0x174] sm:$0xff]
    %v85 = vld [vmem:[%s0 + $0x17c] sm:$0xf]
    %v86 = vld [vmem:[%s1] sm:$0xf]
    %v87 = vld [vmem:[%s1 + $0x4] sm:$0xf]
    %v88 = vld [vmem:[%s1 + $0x8] sm:$0xf]
    %v89 = vld [vmem:[%s1 + $0xc] sm:$0xf]
    %v90 = vld [vmem:[%s1 + $0x10] sm:$0xf]
    %v91 = vld [vmem:[%s1 + $0x14] sm:$0xf]
    %v92 = vld [vmem:[%s1 + $0x18] sm:$0xf]
    %v93 = vld [vmem:[%s1 + $0x1c] sm:$0xf]
    %v94 = vld [vmem:[%s1 + $0x20] sm:$0xf]
    %v95 = vld [vmem:[%s1 + $0x24] sm:$0xf]
    %v96 = vld [vmem:[%s1 + $0x28] sm:$0xf]
    %v97 = vld [vmem:[%s1 + $0x2c] sm:$0xf]
    %v98 = vld [vmem:[%s1 + $0x30] sm:$0xf]
    %v99 = vld [vmem:[%s1 + $0x34] sm:$0xf]
    %v100 = vld [vmem:[%s1 + $0x38] sm:$0xf]
    %v101 = vld [vmem:[%s1 + $0x3c] sm:$0xf]
    %v102 = vld [vmem:[%s1 + $0x40] sm:$0xf]
    %v103 = vld [vmem:[%s1 + $0x44] sm:$0xf]
    %v104 = vld [vmem:[%s1 + $0x48] sm:$0xf]
    %v105 = vld [vmem:[%s1 + $0x4c] sm:$0xf]
    %v106 = vld [vmem:[%s1 + $0x50] sm:$0xf]
    %v107 = vld [vmem:[%s1 + $0x54] sm:$0xf]
    %v108 = vld [vmem:[%s1 + $0x58] sm:$0xf]
    %v109 = vld [vmem:[%s1 + $0x5c] sm:$0xf]
    %v110 = vld [vmem:[%s1 + $0x60] sm:$0xf]
    %v111 = vld [vmem:[%s1 + $0x64] sm:$0xf]
    %v112 = vld [vmem:[%s1 + $0x68] sm:$0xf]
    %v113 = vld [vmem:[%s1 + $0x6c] sm:$0xf]
    %v114 = vld [vmem:[%s1 + $0x70] sm:$0xf]
    %v115 = vld [vmem:[%s1 + $0x74] sm:$0xf]
    %v116 = vld [vmem:[%s1 + $0x78] sm:$0xf]
    %v117 = vld [vmem:[%s1 + $0x7c] sm:$0xf]
    %v118 = vld [vmem:[%s1 + $0x80] sm:$0xf]
    %v119 = vld [vmem:[%s1 + $0x84] sm:$0xf]
    %v120 = vld [vmem:[%s1 + $0x88] sm:$0xf]
    %v121 = vld [vmem:[%s1 + $0x8c] sm:$0xf]
    %v122 = vld [vmem:[%s1 + $0x90] sm:$0xf]
    %v123 = vld [vmem:[%s1 + $0x94] sm:$0xf]
    %v124 = vld [vmem:[%s1 + $0x98] sm:$0xf]
    %v125 = vld [vmem:[%s1 + $0x9c] sm:$0xf]
    %v126 = vld [vmem:[%s1 + $0xa0] sm:$0xf]
    %v127 = vld [vmem:[%s1 + $0xa4] sm:$0xf]
    %v128 = vld [vmem:[%s1 + $0xa8] sm:$0xf]
    %v129 = vld [vmem:[%s1 + $0xac] sm:$0xf]
    %v130 = vld [vmem:[%s1 + $0xb0] sm:$0xf]
    %v131 = vld [vmem:[%s1 + $0xb4] sm:$0xf]
    %v132 = vld [vmem:[%s1 + $0xb8] sm:$0xf]
    %v133 = vld [vmem:[%s1 + $0xbc] sm:$0xf]
    %v198 = vunpack.c.l.b16 %v22
    %v199 = vunpack.c.h.b16 %v22
    %v200 = vunpack.c.l.b16 %v23
    %v201 = vunpack.c.l.b16 %v24
    %v202 = vunpack.c.h.b16 %v24
    %v203 = vunpack.c.l.b16 %v25
    %v204 = vunpack.c.l.b16 %v26
    %v205 = vunpack.c.h.b16 %v26
    %v206 = vunpack.c.l.b16 %v27
    %v207 = vunpack.c.l.b16 %v28
    %v208 = vunpack.c.h.b16 %v28
    %v209 = vunpack.c.l.b16 %v29
    %v210 = vunpack.c.l.b16 %v30
    %v211 = vunpack.c.h.b16 %v30
    %v212 = vunpack.c.l.b16 %v31
    %v213 = vunpack.c.l.b16 %v32
    %v214 = vunpack.c.h.b16 %v32
    %v215 = vunpack.c.l.b16 %v33
    %v216 = vunpack.c.l.b16 %v34
    %v217 = vunpack.c.h.b16 %v34
    %v218 = vunpack.c.l.b16 %v35
    %v219 = vunpack.c.l.b16 %v36
    %v220 = vunpack.c.h.b16 %v36
    %v221 = vunpack.c.l.b16 %v37
    %v222 = vunpack.c.l.b16 %v38
    %v223 = vunpack.c.h.b16 %v38
    %v224 = vunpack.c.l.b16 %v39
    %v225 = vunpack.c.l.b16 %v40
    %v226 = vunpack.c.h.b16 %v40
    %v227 = vunpack.c.l.b16 %v41
    %v228 = vunpack.c.l.b16 %v42
    %v229 = vunpack.c.h.b16 %v42
    %v230 = vunpack.c.l.b16 %v43
    %v231 = vunpack.c.l.b16 %v44
    %v232 = vunpack.c.h.b16 %v44
    %v233 = vunpack.c.l.b16 %v45
    %v234 = vunpack.c.l.b16 %v46
    %v235 = vunpack.c.h.b16 %v46
    %v236 = vunpack.c.l.b16 %v47
    %v237 = vunpack.c.l.b16 %v48
    %v238 = vunpack.c.h.b16 %v48
    %v239 = vunpack.c.l.b16 %v49
    %v240 = vunpack.c.l.b16 %v50
    %v241 = vunpack.c.h.b16 %v50
    %v242 = vunpack.c.l.b16 %v51
    %v243 = vunpack.c.l.b16 %v52
    %v244 = vunpack.c.h.b16 %v52
    %v245 = vunpack.c.l.b16 %v53
    %v246 = vunpack.c.l.b16 %v54
    %v247 = vunpack.c.h.b16 %v54
    %v248 = vunpack.c.l.b16 %v55
    %v249 = vunpack.c.l.b16 %v56
    %v250 = vunpack.c.h.b16 %v56
    %v251 = vunpack.c.l.b16 %v57
    %v252 = vunpack.c.l.b16 %v58
    %v253 = vunpack.c.h.b16 %v58
    %v254 = vunpack.c.l.b16 %v59
    %v255 = vunpack.c.l.b16 %v60
    %v256 = vunpack.c.h.b16 %v60
    %v257 = vunpack.c.l.b16 %v61
    %v258 = vunpack.c.l.b16 %v62
    %v259 = vunpack.c.h.b16 %v62
    %v260 = vunpack.c.l.b16 %v63
    %v261 = vunpack.c.l.b16 %v64
    %v262 = vunpack.c.h.b16 %v64
    %v263 = vunpack.c.l.b16 %v65
    %v264 = vunpack.c.l.b16 %v66
    %v265 = vunpack.c.h.b16 %v66
    %v266 = vunpack.c.l.b16 %v67
    %v267 = vunpack.c.l.b16 %v68
    %v268 = vunpack.c.h.b16 %v68
    %v269 = vunpack.c.l.b16 %v69
    %v270 = vunpack.c.l.b16 %v70
    %v271 = vunpack.c.h.b16 %v70
    %v272 = vunpack.c.l.b16 %v71
    %v273 = vunpack.c.l.b16 %v72
    %v274 = vunpack.c.h.b16 %v72
    %v275 = vunpack.c.l.b16 %v73
    %v276 = vunpack.c.l.b16 %v74
    %v277 = vunpack.c.h.b16 %v74
    %v278 = vunpack.c.l.b16 %v75
    %v279 = vunpack.c.l.b16 %v76
    %v280 = vunpack.c.h.b16 %v76
    %v281 = vunpack.c.l.b16 %v77
    %v282 = vunpack.c.l.b16 %v78
    %v283 = vunpack.c.h.b16 %v78
    %v284 = vunpack.c.l.b16 %v79
    %v285 = vunpack.c.l.b16 %v80
    %v286 = vunpack.c.h.b16 %v80
    %v287 = vunpack.c.l.b16 %v81
    %v288 = vunpack.c.l.b16 %v82
    %v289 = vunpack.c.h.b16 %v82
    %v290 = vunpack.c.l.b16 %v83
    %v291 = vunpack.c.l.b16 %v84
    %v292 = vunpack.c.h.b16 %v84
    %v293 = vunpack.c.l.b16 %v85
    %v294 = vpack.c.b16 %v201, %v198
    %v295 = vpack.c.b16 %v202, %v199
    %v296 = vpack.c.b16 %v203, %v200
    %v297 = vpack.c.b16 %v207, %v204
    %v298 = vpack.c.b16 %v208, %v205
    %v299 = vpack.c.b16 %v209, %v206
    %v300 = vpack.c.b16 %v213, %v210
    %v301 = vpack.c.b16 %v214, %v211
    %v302 = vpack.c.b16 %v215, %v212
    %v303 = vpack.c.b16 %v219, %v216
    %v304 = vpack.c.b16 %v220, %v217
    %v305 = vpack.c.b16 %v221, %v218
    %v306 = vpack.c.b16 %v225, %v222
    %v307 = vpack.c.b16 %v226, %v223
    %v308 = vpack.c.b16 %v227, %v224
    %v309 = vpack.c.b16 %v231, %v228
    %v310 = vpack.c.b16 %v232, %v229
    %v311 = vpack.c.b16 %v233, %v230
    %v312 = vpack.c.b16 %v237, %v234
    %v313 = vpack.c.b16 %v238, %v235
    %v314 = vpack.c.b16 %v239, %v236
    %v315 = vpack.c.b16 %v243, %v240
    %v316 = vpack.c.b16 %v244, %v241
    %v317 = vpack.c.b16 %v245, %v242
    %v318 = vpack.c.b16 %v249, %v246
    %v319 = vpack.c.b16 %v250, %v247
    %v320 = vpack.c.b16 %v251, %v248
    %v321 = vpack.c.b16 %v255, %v252
    %v322 = vpack.c.b16 %v256, %v253
    %v323 = vpack.c.b16 %v257, %v254
    %v324 = vpack.c.b16 %v261, %v258
    %v325 = vpack.c.b16 %v262, %v259
    %v326 = vpack.c.b16 %v263, %v260
    %v327 = vpack.c.b16 %v267, %v264
    %v328 = vpack.c.b16 %v268, %v265
    %v329 = vpack.c.b16 %v269, %v266
    %v330 = vpack.c.b16 %v273, %v270
    %v331 = vpack.c.b16 %v274, %v271
    %v332 = vpack.c.b16 %v275, %v272
    %v333 = vpack.c.b16 %v279, %v276
    %v334 = vpack.c.b16 %v280, %v277
    %v335 = vpack.c.b16 %v281, %v278
    %v336 = vpack.c.b16 %v285, %v282
    %v337 = vpack.c.b16 %v286, %v283
    %v338 = vpack.c.b16 %v287, %v284
    %v339 = vpack.c.b16 %v291, %v288
    %v340 = vpack.c.b16 %v292, %v289
    %v341 = vpack.c.b16 %v293, %v290
    %v438 = vunpack.c.l.b16 %v86
    %v439 = vunpack.c.l.b16 %v87
    %v440 = vunpack.c.l.b16 %v88
    %v441 = vunpack.c.l.b16 %v89
    %v442 = vunpack.c.l.b16 %v90
    %v443 = vunpack.c.l.b16 %v91
    %v444 = vunpack.c.l.b16 %v92
    %v445 = vunpack.c.l.b16 %v93
    %v446 = vunpack.c.l.b16 %v94
    %v447 = vunpack.c.l.b16 %v95
    %v448 = vunpack.c.l.b16 %v96
    %v449 = vunpack.c.l.b16 %v97
    %v450 = vunpack.c.l.b16 %v98
    %v451 = vunpack.c.l.b16 %v99
    %v452 = vunpack.c.l.b16 %v100
    %v453 = vunpack.c.l.b16 %v101
    %v454 = vunpack.c.l.b16 %v102
    %v455 = vunpack.c.l.b16 %v103
    %v456 = vunpack.c.l.b16 %v104
    %v457 = vunpack.c.l.b16 %v105
    %v458 = vunpack.c.l.b16 %v106
    %v459 = vunpack.c.l.b16 %v107
    %v460 = vunpack.c.l.b16 %v108
    %v461 = vunpack.c.l.b16 %v109
    %v462 = vunpack.c.l.b16 %v110
    %v463 = vunpack.c.l.b16 %v111
    %v464 = vunpack.c.l.b16 %v112
    %v465 = vunpack.c.l.b16 %v113
    %v466 = vunpack.c.l.b16 %v114
    %v467 = vunpack.c.l.b16 %v115
    %v468 = vunpack.c.l.b16 %v116
    %v469 = vunpack.c.l.b16 %v117
    %v470 = vunpack.c.l.b16 %v118
    %v471 = vunpack.c.l.b16 %v119
    %v472 = vunpack.c.l.b16 %v120
    %v473 = vunpack.c.l.b16 %v121
    %v474 = vunpack.c.l.b16 %v122
    %v475 = vunpack.c.l.b16 %v123
    %v476 = vunpack.c.l.b16 %v124
    %v477 = vunpack.c.l.b16 %v125
    %v478 = vunpack.c.l.b16 %v126
    %v479 = vunpack.c.l.b16 %v127
    %v480 = vunpack.c.l.b16 %v128
    %v481 = vunpack.c.l.b16 %v129
    %v482 = vunpack.c.l.b16 %v130
    %v483 = vunpack.c.l.b16 %v131
    %v484 = vunpack.c.l.b16 %v132
    %v485 = vunpack.c.l.b16 %v133
    %v486 = vpack.c.b16 %v439, %v438
    %v487 = vpack.c.b16 %v441, %v440
    %v488 = vpack.c.b16 %v443, %v442
    %v489 = vpack.c.b16 %v445, %v444
    %v490 = vpack.c.b16 %v447, %v446
    %v491 = vpack.c.b16 %v449, %v448
    %v492 = vpack.c.b16 %v451, %v450
    %v493 = vpack.c.b16 %v453, %v452
    %v494 = vpack.c.b16 %v455, %v454
    %v495 = vpack.c.b16 %v457, %v456
    %v496 = vpack.c.b16 %v459, %v458
    %v497 = vpack.c.b16 %v461, %v460
    %v498 = vpack.c.b16 %v463, %v462
    %v499 = vpack.c.b16 %v465, %v464
    %v500 = vpack.c.b16 %v467, %v466
    %v501 = vpack.c.b16 %v469, %v468
    %v502 = vpack.c.b16 %v471, %v470
    %v503 = vpack.c.b16 %v473, %v472
    %v504 = vpack.c.b16 %v475, %v474
    %v505 = vpack.c.b16 %v477, %v476
    %v506 = vpack.c.b16 %v479, %v478
    %v507 = vpack.c.b16 %v481, %v480
    %v508 = vpack.c.b16 %v483, %v482
    %v509 = vpack.c.b16 %v485, %v484
    %534 = vmatprep.subr.bf16.mxu0 0
    %535 = vmatpush1.bf16.msra.mxu0 %v486
    %536 = vmatprep.subr.bf16.mxu0 0
    %537 = vmatpush1.bf16.msra.mxu0 %v487
    %538 = vmatprep.subr.bf16.mxu0 0
    %539 = vmatpush1.bf16.msra.mxu0 %v488
    %540 = vmatprep.subr.bf16.mxu0 0
    %541 = vmatpush1.bf16.msra.mxu0 %v489
    %542 = vmatprep.subr.bf16.mxu0 0
    %543 = vmatpush1.bf16.msra.mxu0 %v490
    %544 = vmatprep.subr.bf16.mxu0 0
    %545 = vmatpush1.bf16.msra.mxu0 %v491
    %546 = vmatprep.subr.bf16.mxu0 0
    %547 = vmatpush1.bf16.msra.mxu0 %v492
    %548 = vmatprep.subr.bf16.mxu0 0
    %549 = vmatpush1.bf16.msra.mxu0 %v493
    %550 = vmatprep.subr.bf16.mxu0 0
    %551 = vmatpush1.bf16.msra.mxu0 %v494
    %552 = vmatprep.subr.bf16.mxu0 0
    %553 = vmatpush1.bf16.msra.mxu0 %v495
    %554 = vmatprep.subr.bf16.mxu0 0
    %555 = vmatpush1.bf16.msra.mxu0 %v496
    %556 = vmatprep.subr.bf16.mxu0 0
    %557 = vmatpush1.bf16.msra.mxu0 %v497
    %558 = vmatprep.subr.bf16.mxu0 0
    %559 = vmatpush1.bf16.msra.mxu0 %v498
    %560 = vmatprep.subr.bf16.mxu0 0
    %561 = vmatpush1.bf16.msra.mxu0 %v499
    %562 = vmatprep.subr.bf16.mxu0 0
    %563 = vmatpush1.bf16.msra.mxu0 %v500
    %564 = vmatprep.subr.bf16.mxu0 0
    %565 = vmatpush1.bf16.msra.mxu0 %v501
    %566 = vmatprep.mubr.bf16.mxu0 %v295
    %567 = vmatmul.mubr.bf16.gmra.mrb[0].mxu0 %v294
    %v568 = vpop.f32.mrb[0].mxu0
    %v569 = vadd.f32 0.0, %v568
    %v570 = vpop.f32.mrb[0].mxu0
    %v571 = vpop.f32.mrb[0].mxu0
    %v572 = vadd.f32 0.0, %v571
    %v573 = vpop.f32.mrb[0].mxu0
    %574 = vmatprep.mubr.bf16.mxu0 %v298
    %575 = vmatmul.mubr.bf16.gmra.mrb[0].mxu0 %v297
    %v576 = vpop.f32.mrb[0].mxu0
    %v577 = vadd.f32 0.0, %v576
    %v578 = vpop.f32.mrb[0].mxu0
    %v579 = vpop.f32.mrb[0].mxu0
    %v580 = vadd.f32 0.0, %v579
    %v581 = vpop.f32.mrb[0].mxu0
    %582 = vmatprep.mubr.bf16.mxu0 %v301
    %583 = vmatmul.mubr.bf16.gmra.mrb[0].mxu0 %v300
    %v584 = vpop.f32.mrb[0].mxu0
    %v585 = vadd.f32 0.0, %v584
    %v586 = vpop.f32.mrb[0].mxu0
    %v587 = vpop.f32.mrb[0].mxu0
    %v588 = vadd.f32 0.0, %v587
    %v589 = vpop.f32.mrb[0].mxu0
    %590 = vmatprep.mubr.bf16.mxu0 %v304
    %591 = vmatmul.mubr.bf16.gmra.mrb[0].mxu0 %v303
    %v592 = vpop.f32.mrb[0].mxu0
    %v593 = vadd.f32 0.0, %v592
    %v594 = vpop.f32.mrb[0].mxu0
    %v595 = vpop.f32.mrb[0].mxu0
    %v596 = vadd.f32 0.0, %v595
    %v597 = vpop.f32.mrb[0].mxu0
    %598 = vmatprep.mubr.bf16.mxu0 %v307
    %599 = vmatmul.mubr.bf16.gmra.mrb[0].mxu0 %v306
    %v600 = vpop.f32.mrb[0].mxu0
    %v601 = vadd.f32 0.0, %v600
    %v602 = vpop.f32.mrb[0].mxu0
    %v603 = vpop.f32.mrb[0].mxu0
    %v604 = vadd.f32 0.0, %v603
    %v605 = vpop.f32.mrb[0].mxu0
    %606 = vmatprep.mubr.bf16.mxu0 %v310
    %607 = vmatmul.mubr.bf16.gmra.mrb[0].mxu0 %v309
    %v608 = vpop.f32.mrb[0].mxu0
    %v609 = vadd.f32 0.0, %v608
    %v610 = vpop.f32.mrb[0].mxu0
    %v611 = vpop.f32.mrb[0].mxu0
    %v612 = vadd.f32 0.0, %v611
    %v613 = vpop.f32.mrb[0].mxu0
    %614 = vmatprep.mubr.bf16.mxu0 %v313
    %615 = vmatmul.mubr.bf16.gmra.mrb[0].mxu0 %v312
    %v616 = vpop.f32.mrb[0].mxu0
    %v617 = vadd.f32 0.0, %v616
    %v618 = vpop.f32.mrb[0].mxu0
    %v619 = vpop.f32.mrb[0].mxu0
    %v620 = vadd.f32 0.0, %v619
    %v621 = vpop.f32.mrb[0].mxu0
    %622 = vmatprep.mubr.bf16.mxu0 %v316
    %623 = vmatmul.mubr.bf16.gmra.mrb[0].mxu0 %v315
    %v624 = vpop.f32.mrb[0].mxu0
    %v625 = vadd.f32 0.0, %v624
    %v626 = vpop.f32.mrb[0].mxu0
    %v627 = vpop.f32.mrb[0].mxu0
    %v628 = vadd.f32 0.0, %v627
    %v629 = vpop.f32.mrb[0].mxu0
    %630 = vmatprep.mubr.bf16.mxu0 %v319
    %631 = vmatmul.mubr.bf16.gmra.mrb[0].mxu0 %v318
    %v632 = vpop.f32.mrb[0].mxu0
    %v633 = vadd.f32 0.0, %v632
    %v634 = vpop.f32.mrb[0].mxu0
    %v635 = vpop.f32.mrb[0].mxu0
    %v636 = vadd.f32 0.0, %v635
    %v637 = vpop.f32.mrb[0].mxu0
    %638 = vmatprep.mubr.bf16.mxu0 %v322
    %639 = vmatmul.mubr.bf16.gmra.mrb[0].mxu0 %v321
    %v640 = vpop.f32.mrb[0].mxu0
    %v641 = vadd.f32 0.0, %v640
    %v642 = vpop.f32.mrb[0].mxu0
    %v643 = vpop.f32.mrb[0].mxu0
    %v644 = vadd.f32 0.0, %v643
    %v645 = vpop.f32.mrb[0].mxu0
    %646 = vmatprep.mubr.bf16.mxu0 %v325
    %647 = vmatmul.mubr.bf16.gmra.mrb[0].mxu0 %v324
    %v648 = vpop.f32.mrb[0].mxu0
    %v649 = vadd.f32 0.0, %v648
    %v650 = vpop.f32.mrb[0].mxu0
    %v651 = vpop.f32.mrb[0].mxu0
    %v652 = vadd.f32 0.0, %v651
    %v653 = vpop.f32.mrb[0].mxu0
    %654 = vmatprep.mubr.bf16.mxu0 %v328
    %655 = vmatmul.mubr.bf16.gmra.mrb[0].mxu0 %v327
    %v656 = vpop.f32.mrb[0].mxu0
    %v657 = vadd.f32 0.0, %v656
    %v658 = vpop.f32.mrb[0].mxu0
    %v659 = vpop.f32.mrb[0].mxu0
    %v660 = vadd.f32 0.0, %v659
    %v661 = vpop.f32.mrb[0].mxu0
    %662 = vmatprep.mubr.bf16.mxu0 %v331
    %663 = vmatmul.mubr.bf16.gmra.mrb[0].mxu0 %v330
    %v664 = vpop.f32.mrb[0].mxu0
    %v665 = vadd.f32 0.0, %v664
    %v666 = vpop.f32.mrb[0].mxu0
    %v667 = vpop.f32.mrb[0].mxu0
    %v668 = vadd.f32 0.0, %v667
    %v669 = vpop.f32.mrb[0].mxu0
    %670 = vmatprep.mubr.bf16.mxu0 %v334
    %671 = vmatmul.mubr.bf16.gmra.mrb[0].mxu0 %v333
    %v672 = vpop.f32.mrb[0].mxu0
    %v673 = vadd.f32 0.0, %v672
    %v674 = vpop.f32.mrb[0].mxu0
    %v675 = vpop.f32.mrb[0].mxu0
    %v676 = vadd.f32 0.0, %v675
    %v677 = vpop.f32.mrb[0].mxu0
    %678 = vmatprep.mubr.bf16.mxu0 %v337
    %679 = vmatmul.mubr.bf16.gmra.mrb[0].mxu0 %v336
    %v680 = vpop.f32.mrb[0].mxu0
    %v681 = vadd.f32 0.0, %v680
    %v682 = vpop.f32.mrb[0].mxu0
    %v683 = vpop.f32.mrb[0].mxu0
    %v684 = vadd.f32 0.0, %v683
    %v685 = vpop.f32.mrb[0].mxu0
    %686 = vmatprep.mubr.bf16.mxu0 %v340
    %687 = vmatmul.mubr.bf16.gmra.mrb[0].mxu0 %v339
    %v688 = vpop.f32.mrb[0].mxu0
    %v689 = vadd.f32 0.0, %v688
    %v690 = vpop.f32.mrb[0].mxu0
    %v691 = vpop.f32.mrb[0].mxu0
    %v692 = vadd.f32 0.0, %v691
    %v693 = vpop.f32.mrb[0].mxu0
    %694 = vdwg.mxu0
    %695 = vmatprep.subr.bf16.mxu0 0
    %696 = vmatpush1.bf16.msra.mxu0 %v502
    %697 = vmatprep.subr.bf16.mxu0 0
    %698 = vmatpush1.bf16.msra.mxu0 %v503
    %699 = vmatprep.subr.bf16.mxu0 0
    %700 = vmatpush1.bf16.msra.mxu0 %v504
    %701 = vmatprep.subr.bf16.mxu0 0
    %702 = vmatpush1.bf16.msra.mxu0 %v505
    %703 = vmatprep.subr.bf16.mxu0 0
    %704 = vmatpush1.bf16.msra.mxu0 %v506
    %705 = vmatprep.subr.bf16.mxu0 0
    %706 = vmatpush1.bf16.msra.mxu0 %v507
    %707 = vmatprep.subr.bf16.mxu0 0
    %708 = vmatpush1.bf16.msra.mxu0 %v508
    %709 = vmatprep.subr.bf16.mxu0 0
    %710 = vmatpush1.bf16.msra.mxu0 %v509
    %711 = vmatprep.subr.bf16.mxu0 0
    %712 = vmatpush1.bf16.msra.mxu0 0
    %713 = vmatprep.subr.bf16.mxu0 0
    %714 = vmatpush1.bf16.msra.mxu0 0
    %715 = vmatprep.subr.bf16.mxu0 0
    %716 = vmatpush1.bf16.msra.mxu0 0
    %717 = vmatprep.subr.bf16.mxu0 0
    %718 = vmatpush1.bf16.msra.mxu0 0
    %719 = vmatprep.subr.bf16.mxu0 0
    %720 = vmatpush1.bf16.msra.mxu0 0
    %721 = vmatprep.subr.bf16.mxu0 0
    %722 = vmatpush1.bf16.msra.mxu0 0
    %723 = vmatprep.subr.bf16.mxu0 0
    %724 = vmatpush1.bf16.msra.mxu0 0
    %725 = vmatprep.subr.bf16.mxu0 0
    %726 = vmatpush1.bf16.msra.mxu0 0
    %727 = vmatprep.mubr.bf16.mxu0 0
    %728 = vmatmul.mubr.bf16.gmra.mrb[0].mxu0 %v296
    %v729 = vpop.f32.mrb[0].mxu0
    %v730 = vadd.f32 %v569, %v729
    %v731 = vpop.f32.mrb[0].mxu0
    %v732 = vpop.f32.mrb[0].mxu0
    %v733 = vadd.f32 %v572, %v732
    %v734 = vpop.f32.mrb[0].mxu0
    %735 = vmatprep.mubr.bf16.mxu0 0
    %736 = vmatmul.mubr.bf16.gmra.mrb[0].mxu0 %v299
    %v737 = vpop.f32.mrb[0].mxu0
    %v738 = vadd.f32 %v577, %v737
    %v739 = vpop.f32.mrb[0].mxu0
    %v740 = vpop.f32.mrb[0].mxu0
    %v741 = vadd.f32 %v580, %v740
    %v742 = vpop.f32.mrb[0].mxu0
    %743 = vmatprep.mubr.bf16.mxu0 0
    %744 = vmatmul.mubr.bf16.gmra.mrb[0].mxu0 %v302
    %v745 = vpop.f32.mrb[0].mxu0
    %v746 = vadd.f32 %v585, %v745
    %v747 = vpop.f32.mrb[0].mxu0
    %v748 = vpop.f32.mrb[0].mxu0
    %v749 = vadd.f32 %v588, %v748
    %v750 = vpop.f32.mrb[0].mxu0
    %751 = vmatprep.mubr.bf16.mxu0 0
    %752 = vmatmul.mubr.bf16.gmra.mrb[0].mxu0 %v305
    %v753 = vpop.f32.mrb[0].mxu0
    %v754 = vadd.f32 %v593, %v753
    %v755 = vpop.f32.mrb[0].mxu0
    %v756 = vpop.f32.mrb[0].mxu0
    %v757 = vadd.f32 %v596, %v756
    %v758 = vpop.f32.mrb[0].mxu0
    %759 = vmatprep.mubr.bf16.mxu0 0
    %760 = vmatmul.mubr.bf16.gmra.mrb[0].mxu0 %v308
    %v761 = vpop.f32.mrb[0].mxu0
    %v762 = vadd.f32 %v601, %v761
    %v763 = vpop.f32.mrb[0].mxu0
    %v764 = vpop.f32.mrb[0].mxu0
    %v765 = vadd.f32 %v604, %v764
    %v766 = vpop.f32.mrb[0].mxu0
    %767 = vmatprep.mubr.bf16.mxu0 0
    %768 = vmatmul.mubr.bf16.gmra.mrb[0].mxu0 %v311
    %v769 = vpop.f32.mrb[0].mxu0
    %v770 = vadd.f32 %v609, %v769
    %v771 = vpop.f32.mrb[0].mxu0
    %v772 = vpop.f32.mrb[0].mxu0
    %v773 = vadd.f32 %v612, %v772
    %v774 = vpop.f32.mrb[0].mxu0
    %775 = vmatprep.mubr.bf16.mxu0 0
    %776 = vmatmul.mubr.bf16.gmra.mrb[0].mxu0 %v314
    %v777 = vpop.f32.mrb[0].mxu0
    %v778 = vadd.f32 %v617, %v777
    %v779 = vpop.f32.mrb[0].mxu0
    %v780 = vpop.f32.mrb[0].mxu0
    %v781 = vadd.f32 %v620, %v780
    %v782 = vpop.f32.mrb[0].mxu0
    %783 = vmatprep.mubr.bf16.mxu0 0
    %784 = vmatmul.mubr.bf16.gmra.mrb[0].mxu0 %v317
    %v785 = vpop.f32.mrb[0].mxu0
    %v786 = vadd.f32 %v625, %v785
    %v787 = vpop.f32.mrb[0].mxu0
    %v788 = vpop.f32.mrb[0].mxu0
    %v789 = vadd.f32 %v628, %v788
    %v790 = vpop.f32.mrb[0].mxu0
    %791 = vmatprep.mubr.bf16.mxu0 0
    %792 = vmatmul.mubr.bf16.gmra.mrb[0].mxu0 %v320
    %v793 = vpop.f32.mrb[0].mxu0
    %v794 = vadd.f32 %v633, %v793
    %v795 = vpop.f32.mrb[0].mxu0
    %v796 = vpop.f32.mrb[0].mxu0
    %v797 = vadd.f32 %v636, %v796
    %v798 = vpop.f32.mrb[0].mxu0
    %799 = vmatprep.mubr.bf16.mxu0 0
    %800 = vmatmul.mubr.bf16.gmra.mrb[0].mxu0 %v323
    %v801 = vpop.f32.mrb[0].mxu0
    %v802 = vadd.f32 %v641, %v801
    %v803 = vpop.f32.mrb[0].mxu0
    %v804 = vpop.f32.mrb[0].mxu0
    %v805 = vadd.f32 %v644, %v804
    %v806 = vpop.f32.mrb[0].mxu0
    %807 = vmatprep.mubr.bf16.mxu0 0
    %808 = vmatmul.mubr.bf16.gmra.mrb[0].mxu0 %v326
    %v809 = vpop.f32.mrb[0].mxu0
    %v810 = vadd.f32 %v649, %v809
    %v811 = vpop.f32.mrb[0].mxu0
    %v812 = vpop.f32.mrb[0].mxu0
    %v813 = vadd.f32 %v652, %v812
    %v814 = vpop.f32.mrb[0].mxu0
    %815 = vmatprep.mubr.bf16.mxu0 0
    %816 = vmatmul.mubr.bf16.gmra.mrb[0].mxu0 %v329
    %v817 = vpop.f32.mrb[0].mxu0
    %v818 = vadd.f32 %v657, %v817
    %v819 = vpop.f32.mrb[0].mxu0
    %v820 = vpop.f32.mrb[0].mxu0
    %v821 = vadd.f32 %v660, %v820
    %v822 = vpop.f32.mrb[0].mxu0
    %823 = vmatprep.mubr.bf16.mxu0 0
    %824 = vmatmul.mubr.bf16.gmra.mrb[0].mxu0 %v332
    %v825 = vpop.f32.mrb[0].mxu0
    %v826 = vadd.f32 %v665, %v825
    %v827 = vpop.f32.mrb[0].mxu0
    %v828 = vpop.f32.mrb[0].mxu0
    %v829 = vadd.f32 %v668, %v828
    %v830 = vpop.f32.mrb[0].mxu0
    %831 = vmatprep.mubr.bf16.mxu0 0
    %832 = vmatmul.mubr.bf16.gmra.mrb[0].mxu0 %v335
    %v833 = vpop.f32.mrb[0].mxu0
    %v834 = vadd.f32 %v673, %v833
    %v835 = vpop.f32.mrb[0].mxu0
    %v836 = vpop.f32.mrb[0].mxu0
    %v837 = vadd.f32 %v676, %v836
    %v838 = vpop.f32.mrb[0].mxu0
    %839 = vmatprep.mubr.bf16.mxu0 0
    %840 = vmatmul.mubr.bf16.gmra.mrb[0].mxu0 %v338
    %v841 = vpop.f32.mrb[0].mxu0
    %v842 = vadd.f32 %v681, %v841
    %v843 = vpop.f32.mrb[0].mxu0
    %v844 = vpop.f32.mrb[0].mxu0
    %v845 = vadd.f32 %v684, %v844
    %v846 = vpop.f32.mrb[0].mxu0
    %847 = vmatprep.mubr.bf16.mxu0 0
    %848 = vmatmul.mubr.bf16.gmra.mrb[0].mxu0 %v341
    %v849 = vpop.f32.mrb[0].mxu0
    %v850 = vadd.f32 %v689, %v849
    %v851 = vpop.f32.mrb[0].mxu0
    %v852 = vpop.f32.mrb[0].mxu0
    %v853 = vadd.f32 %v692, %v852
    %v854 = vpop.f32.mrb[0].mxu0
    %855 = vdwg.mxu0
    %v856 = vpack.c.bf16 %v733, %v730
    %v857 = vpack.c.bf16 %v741, %v738
    %v858 = vpack.c.bf16 %v749, %v746
    %v859 = vpack.c.bf16 %v757, %v754
    %v860 = vpack.c.bf16 %v765, %v762
    %v861 = vpack.c.bf16 %v773, %v770
    %v862 = vpack.c.bf16 %v781, %v778
    %v863 = vpack.c.bf16 %v789, %v786
    %v864 = vpack.c.bf16 %v797, %v794
    %v865 = vpack.c.bf16 %v805, %v802
    %v866 = vpack.c.bf16 %v813, %v810
    %v867 = vpack.c.bf16 %v821, %v818
    %v868 = vpack.c.bf16 %v829, %v826
    %v869 = vpack.c.bf16 %v837, %v834
    %v870 = vpack.c.bf16 %v845, %v842
    %v871 = vpack.c.bf16 %v853, %v850
    %v872 = vld [vmem:[%s2] sm:$0xff]
    %v873 = vld [vmem:[%s2 + $0x8] sm:$0xff]
    %v874 = vld [vmem:[%s2 + $0x10] sm:$0xff]
    %v875 = vld [vmem:[%s2 + $0x18] sm:$0xff]
    %v876 = vld [vmem:[%s2 + $0x20] sm:$0xff]
    %v877 = vld [vmem:[%s2 + $0x28] sm:$0xff]
    %v878 = vld [vmem:[%s2 + $0x30] sm:$0xff]
    %v879 = vld [vmem:[%s2 + $0x38] sm:$0xff]
    %v880 = vld [vmem:[%s2 + $0x40] sm:$0xff]
    %v881 = vld [vmem:[%s2 + $0x48] sm:$0xff]
    %v882 = vld [vmem:[%s2 + $0x50] sm:$0xff]
    %v883 = vld [vmem:[%s2 + $0x58] sm:$0xff]
    %v884 = vld [vmem:[%s2 + $0x60] sm:$0xff]
    %v885 = vld [vmem:[%s2 + $0x68] sm:$0xff]
    %v886 = vld [vmem:[%s2 + $0x70] sm:$0xff]
    %v887 = vld [vmem:[%s2 + $0x78] sm:$0xff]
    %v888 = vld [vmem:[%s3] sm:$0x3]
    %v890 = vlaneseq
    %v891 = vshrl.u32 %v890, 7
    %v892 = vsub.s32 0, %v891
    %v893 = vrot.slane %v888, %v892
    %v894 = vlaneseq
    %v895 = vshrl.u32 %v894, 7
    %v896 = vsub.s32 1, %v895
    %v897 = vrot.slane %v888, %v896
    %v916 = vunpack.c.l.b16 %v872
    %v917 = vunpack.c.h.b16 %v872
    %v918 = vunpack.c.l.b16 %v873
    %v919 = vunpack.c.h.b16 %v873
    %v920 = vunpack.c.l.b16 %v874
    %v921 = vunpack.c.h.b16 %v874
    %v922 = vunpack.c.l.b16 %v875
    %v923 = vunpack.c.h.b16 %v875
    %v924 = vunpack.c.l.b16 %v876
    %v925 = vunpack.c.h.b16 %v876
    %v926 = vunpack.c.l.b16 %v877
    %v927 = vunpack.c.h.b16 %v877
    %v928 = vunpack.c.l.b16 %v878
    %v929 = vunpack.c.h.b16 %v878
    %v930 = vunpack.c.l.b16 %v879
    %v931 = vunpack.c.h.b16 %v879
    %v932 = vunpack.c.l.b16 %v880
    %v933 = vunpack.c.h.b16 %v880
    %v934 = vunpack.c.l.b16 %v881
    %v935 = vunpack.c.h.b16 %v881
    %v936 = vunpack.c.l.b16 %v882
    %v937 = vunpack.c.h.b16 %v882
    %v938 = vunpack.c.l.b16 %v883
    %v939 = vunpack.c.h.b16 %v883
    %v940 = vunpack.c.l.b16 %v884
    %v941 = vunpack.c.h.b16 %v884
    %v942 = vunpack.c.l.b16 %v885
    %v943 = vunpack.c.h.b16 %v885
    %v944 = vunpack.c.l.b16 %v886
    %v945 = vunpack.c.h.b16 %v886
    %v946 = vunpack.c.l.b16 %v887
    %v947 = vunpack.c.h.b16 %v887
    %v948 = vpack.c.b16 %v918, %v916
    %v949 = vpack.c.b16 %v919, %v917
    %v950 = vpack.c.b16 %v922, %v920
    %v951 = vpack.c.b16 %v923, %v921
    %v952 = vpack.c.b16 %v926, %v924
    %v953 = vpack.c.b16 %v927, %v925
    %v954 = vpack.c.b16 %v930, %v928
    %v955 = vpack.c.b16 %v931, %v929
    %v956 = vpack.c.b16 %v934, %v932
    %v957 = vpack.c.b16 %v935, %v933
    %v958 = vpack.c.b16 %v938, %v936
    %v959 = vpack.c.b16 %v939, %v937
    %v960 = vpack.c.b16 %v942, %v940
    %v961 = vpack.c.b16 %v943, %v941
    %v962 = vpack.c.b16 %v946, %v944
    %v963 = vpack.c.b16 %v947, %v945
    %980 = vmatprep.subr.bf16.mxu0 %v949
    %981 = vmatpush1.bf16.msra.mxu0 %v948
    %982 = vmatprep.subr.bf16.mxu0 %v951
    %983 = vmatpush1.bf16.msra.mxu0 %v950
    %984 = vmatprep.subr.bf16.mxu0 %v953
    %985 = vmatpush1.bf16.msra.mxu0 %v952
    %986 = vmatprep.subr.bf16.mxu0 %v955
    %987 = vmatpush1.bf16.msra.mxu0 %v954
    %988 = vmatprep.subr.bf16.mxu0 %v957
    %989 = vmatpush1.bf16.msra.mxu0 %v956
    %990 = vmatprep.subr.bf16.mxu0 %v959
    %991 = vmatpush1.bf16.msra.mxu0 %v958
    %992 = vmatprep.subr.bf16.mxu0 %v961
    %993 = vmatpush1.bf16.msra.mxu0 %v960
    %994 = vmatprep.subr.bf16.mxu0 %v963
    %995 = vmatpush1.bf16.msra.mxu0 %v962
    %996 = vmatprep.subr.bf16.mxu0 0
    %997 = vmatpush1.bf16.msra.mxu0 0
    %998 = vmatprep.subr.bf16.mxu0 0
    %999 = vmatpush1.bf16.msra.mxu0 0
    %1000 = vmatprep.subr.bf16.mxu0 0
    %1001 = vmatpush1.bf16.msra.mxu0 0
    %1002 = vmatprep.subr.bf16.mxu0 0
    %1003 = vmatpush1.bf16.msra.mxu0 0
    %1004 = vmatprep.subr.bf16.mxu0 0
    %1005 = vmatpush1.bf16.msra.mxu0 0
    %1006 = vmatprep.subr.bf16.mxu0 0
    %1007 = vmatpush1.bf16.msra.mxu0 0
    %1008 = vmatprep.subr.bf16.mxu0 0
    %1009 = vmatpush1.bf16.msra.mxu0 0
    %1010 = vmatprep.subr.bf16.mxu0 0
    %1011 = vmatpush1.bf16.msra.mxu0 0
    %1012 = vmatprep.mubr.bf16.mxu0 0
    %1013 = vmatmul.mubr.bf16.gmra.mrb[0].mxu0 %v856
    %v1014 = vpop.f32.mrb[0].mxu0
    %v1015 = vadd.f32 %v893, %v1014
    %v1016 = vpop.f32.mrb[0].mxu0
    %v1017 = vadd.f32 %v897, %v1016
    %v1018 = vpop.f32.mrb[0].mxu0
    %v1019 = vadd.f32 %v893, %v1018
    %v1020 = vpop.f32.mrb[0].mxu0
    %v1021 = vadd.f32 %v897, %v1020
    %1022 = vmatprep.mubr.bf16.mxu0 0
    %1023 = vmatmul.mubr.bf16.gmra.mrb[0].mxu0 %v857
    %v1024 = vpop.f32.mrb[0].mxu0
    %v1025 = vadd.f32 %v893, %v1024
    %v1026 = vpop.f32.mrb[0].mxu0
    %v1027 = vadd.f32 %v897, %v1026
    %v1028 = vpop.f32.mrb[0].mxu0
    %v1029 = vadd.f32 %v893, %v1028
    %v1030 = vpop.f32.mrb[0].mxu0
    %v1031 = vadd.f32 %v897, %v1030
    %1032 = vmatprep.mubr.bf16.mxu0 0
    %1033 = vmatmul.mubr.bf16.gmra.mrb[0].mxu0 %v858
    %v1034 = vpop.f32.mrb[0].mxu0
    %v1035 = vadd.f32 %v893, %v1034
    %v1036 = vpop.f32.mrb[0].mxu0
    %v1037 = vadd.f32 %v897, %v1036
    %v1038 = vpop.f32.mrb[0].mxu0
    %v1039 = vadd.f32 %v893, %v1038
    %v1040 = vpop.f32.mrb[0].mxu0
    %v1041 = vadd.f32 %v897, %v1040
    %1042 = vmatprep.mubr.bf16.mxu0 0
    %1043 = vmatmul.mubr.bf16.gmra.mrb[0].mxu0 %v859
    %v1044 = vpop.f32.mrb[0].mxu0
    %v1045 = vadd.f32 %v893, %v1044
    %v1046 = vpop.f32.mrb[0].mxu0
    %v1047 = vadd.f32 %v897, %v1046
    %v1048 = vpop.f32.mrb[0].mxu0
    %v1049 = vadd.f32 %v893, %v1048
    %v1050 = vpop.f32.mrb[0].mxu0
    %v1051 = vadd.f32 %v897, %v1050
    %1052 = vmatprep.mubr.bf16.mxu0 0
    %1053 = vmatmul.mubr.bf16.gmra.mrb[0].mxu0 %v860
    %v1054 = vpop.f32.mrb[0].mxu0
    %v1055 = vadd.f32 %v893, %v1054
    %v1056 = vpop.f32.mrb[0].mxu0
    %v1057 = vadd.f32 %v897, %v1056
    %v1058 = vpop.f32.mrb[0].mxu0
    %v1059 = vadd.f32 %v893, %v1058
    %v1060 = vpop.f32.mrb[0].mxu0
    %v1061 = vadd.f32 %v897, %v1060
    %1062 = vmatprep.mubr.bf16.mxu0 0
    %1063 = vmatmul.mubr.bf16.gmra.mrb[0].mxu0 %v861
    %v1064 = vpop.f32.mrb[0].mxu0
    %v1065 = vadd.f32 %v893, %v1064
    %v1066 = vpop.f32.mrb[0].mxu0
    %v1067 = vadd.f32 %v897, %v1066
    %v1068 = vpop.f32.mrb[0].mxu0
    %v1069 = vadd.f32 %v893, %v1068
    %v1070 = vpop.f32.mrb[0].mxu0
    %v1071 = vadd.f32 %v897, %v1070
    %1072 = vmatprep.mubr.bf16.mxu0 0
    %1073 = vmatmul.mubr.bf16.gmra.mrb[0].mxu0 %v862
    %v1074 = vpop.f32.mrb[0].mxu0
    %v1075 = vadd.f32 %v893, %v1074
    %v1076 = vpop.f32.mrb[0].mxu0
    %v1077 = vadd.f32 %v897, %v1076
    %v1078 = vpop.f32.mrb[0].mxu0
    %v1079 = vadd.f32 %v893, %v1078
    %v1080 = vpop.f32.mrb[0].mxu0
    %v1081 = vadd.f32 %v897, %v1080
    %1082 = vmatprep.mubr.bf16.mxu0 0
    %1083 = vmatmul.mubr.bf16.gmra.mrb[0].mxu0 %v863
    %v1084 = vpop.f32.mrb[0].mxu0
    %v1085 = vadd.f32 %v893, %v1084
    %v1086 = vpop.f32.mrb[0].mxu0
    %v1087 = vadd.f32 %v897, %v1086
    %v1088 = vpop.f32.mrb[0].mxu0
    %v1089 = vadd.f32 %v893, %v1088
    %v1090 = vpop.f32.mrb[0].mxu0
    %v1091 = vadd.f32 %v897, %v1090
    %1092 = vmatprep.mubr.bf16.mxu0 0
    %1093 = vmatmul.mubr.bf16.gmra.mrb[0].mxu0 %v864
    %v1094 = vpop.f32.mrb[0].mxu0
    %v1095 = vadd.f32 %v893, %v1094
    %v1096 = vpop.f32.mrb[0].mxu0
    %v1097 = vadd.f32 %v897, %v1096
    %v1098 = vpop.f32.mrb[0].mxu0
    %v1099 = vadd.f32 %v893, %v1098
    %v1100 = vpop.f32.mrb[0].mxu0
    %v1101 = vadd.f32 %v897, %v1100
    %1102 = vmatprep.mubr.bf16.mxu0 0
    %1103 = vmatmul.mubr.bf16.gmra.mrb[0].mxu0 %v865
    %v1104 = vpop.f32.mrb[0].mxu0
    %v1105 = vadd.f32 %v893, %v1104
    %v1106 = vpop.f32.mrb[0].mxu0
    %v1107 = vadd.f32 %v897, %v1106
    %v1108 = vpop.f32.mrb[0].mxu0
    %v1109 = vadd.f32 %v893, %v1108
    %v1110 = vpop.f32.mrb[0].mxu0
    %v1111 = vadd.f32 %v897, %v1110
    %1112 = vmatprep.mubr.bf16.mxu0 0
    %1113 = vmatmul.mubr.bf16.gmra.mrb[0].mxu0 %v866
    %v1114 = vpop.f32.mrb[0].mxu0
    %v1115 = vadd.f32 %v893, %v1114
    %v1116 = vpop.f32.mrb[0].mxu0
    %v1117 = vadd.f32 %v897, %v1116
    %v1118 = vpop.f32.mrb[0].mxu0
    %v1119 = vadd.f32 %v893, %v1118
    %v1120 = vpop.f32.mrb[0].mxu0
    %v1121 = vadd.f32 %v897, %v1120
    %1122 = vmatprep.mubr.bf16.mxu0 0
    %1123 = vmatmul.mubr.bf16.gmra.mrb[0].mxu0 %v867
    %v1124 = vpop.f32.mrb[0].mxu0
    %v1125 = vadd.f32 %v893, %v1124
    %v1126 = vpop.f32.mrb[0].mxu0
    %v1127 = vadd.f32 %v897, %v1126
    %v1128 = vpop.f32.mrb[0].mxu0
    %v1129 = vadd.f32 %v893, %v1128
    %v1130 = vpop.f32.mrb[0].mxu0
    %v1131 = vadd.f32 %v897, %v1130
    %1132 = vmatprep.mubr.bf16.mxu0 0
    %1133 = vmatmul.mubr.bf16.gmra.mrb[0].mxu0 %v868
    %v1134 = vpop.f32.mrb[0].mxu0
    %v1135 = vadd.f32 %v893, %v1134
    %v1136 = vpop.f32.mrb[0].mxu0
    %v1137 = vadd.f32 %v897, %v1136
    %v1138 = vpop.f32.mrb[0].mxu0
    %v1139 = vadd.f32 %v893, %v1138
    %v1140 = vpop.f32.mrb[0].mxu0
    %v1141 = vadd.f32 %v897, %v1140
    %1142 = vmatprep.mubr.bf16.mxu0 0
    %1143 = vmatmul.mubr.bf16.gmra.mrb[0].mxu0 %v869
    %v1144 = vpop.f32.mrb[0].mxu0
    %v1145 = vadd.f32 %v893, %v1144
    %v1146 = vpop.f32.mrb[0].mxu0
    %v1147 = vadd.f32 %v897, %v1146
    %v1148 = vpop.f32.mrb[0].mxu0
    %v1149 = vadd.f32 %v893, %v1148
    %v1150 = vpop.f32.mrb[0].mxu0
    %v1151 = vadd.f32 %v897, %v1150
    %1152 = vmatprep.mubr.bf16.mxu0 0
    %1153 = vmatmul.mubr.bf16.gmra.mrb[0].mxu0 %v870
    %v1154 = vpop.f32.mrb[0].mxu0
    %v1155 = vadd.f32 %v893, %v1154
    %v1156 = vpop.f32.mrb[0].mxu0
    %v1157 = vadd.f32 %v897, %v1156
    %v1158 = vpop.f32.mrb[0].mxu0
    %v1159 = vadd.f32 %v893, %v1158
    %v1160 = vpop.f32.mrb[0].mxu0
    %v1161 = vadd.f32 %v897, %v1160
    %1162 = vmatprep.mubr.bf16.mxu0 0
    %1163 = vmatmul.mubr.bf16.gmra.mrb[0].mxu0 %v871
    %v1164 = vpop.f32.mrb[0].mxu0
    %v1165 = vadd.f32 %v893, %v1164
    %v1166 = vpop.f32.mrb[0].mxu0
    %v1167 = vadd.f32 %v897, %v1166
    %v1168 = vpop.f32.mrb[0].mxu0
    %v1169 = vadd.f32 %v893, %v1168
    %v1170 = vpop.f32.mrb[0].mxu0
    %v1171 = vadd.f32 %v897, %v1170
    %1172 = vdwg.mxu0
    %1173 = vst [vmem:[#allocation2] sm:$0xff] %v1015
    %1174 = vst [vmem:[#allocation2 + $0x8] sm:$0xff] %v1017
    %1175 = vst [vmem:[#allocation2 + $0x10] sm:$0xff] %v1019
    %1176 = vst [vmem:[#allocation2 + $0x18] sm:$0xff] %v1021
    %1177 = vst [vmem:[#allocation2 + $0x20] sm:$0xff] %v1025
    %1178 = vst [vmem:[#allocation2 + $0x28] sm:$0xff] %v1027
    %1179 = vst [vmem:[#allocation2 + $0x30] sm:$0xff] %v1029
    %1180 = vst [vmem:[#allocation2 + $0x38] sm:$0xff] %v1031
    %1181 = vst [vmem:[#allocation2 + $0x40] sm:$0xff] %v1035
    %1182 = vst [vmem:[#allocation2 + $0x48] sm:$0xff] %v1037
    %1183 = vst [vmem:[#allocation2 + $0x50] sm:$0xff] %v1039
    %1184 = vst [vmem:[#allocation2 + $0x58] sm:$0xff] %v1041
    %1185 = vst [vmem:[#allocation2 + $0x60] sm:$0xff] %v1045
    %1186 = vst [vmem:[#allocation2 + $0x68] sm:$0xff] %v1047
    %1187 = vst [vmem:[#allocation2 + $0x70] sm:$0xff] %v1049
    %1188 = vst [vmem:[#allocation2 + $0x78] sm:$0xff] %v1051
    %1189 = vst [vmem:[#allocation2 + $0x80] sm:$0xff] %v1055
    %1190 = vst [vmem:[#allocation2 + $0x88] sm:$0xff] %v1057
    %1191 = vst [vmem:[#allocation2 + $0x90] sm:$0xff] %v1059
    %1192 = vst [vmem:[#allocation2 + $0x98] sm:$0xff] %v1061
    %1193 = vst [vmem:[#allocation2 + $0xa0] sm:$0xff] %v1065
    %1194 = vst [vmem:[#allocation2 + $0xa8] sm:$0xff] %v1067
    %1195 = vst [vmem:[#allocation2 + $0xb0] sm:$0xff] %v1069
    %1196 = vst [vmem:[#allocation2 + $0xb8] sm:$0xff] %v1071
    %1197 = vst [vmem:[#allocation2 + $0xc0] sm:$0xff] %v1075
    %1198 = vst [vmem:[#allocation2 + $0xc8] sm:$0xff] %v1077
    %1199 = vst [vmem:[#allocation2 + $0xd0] sm:$0xff] %v1079
    %1200 = vst [vmem:[#allocation2 + $0xd8] sm:$0xff] %v1081
    %1201 = vst [vmem:[#allocation2 + $0xe0] sm:$0xff] %v1085
    %1202 = vst [vmem:[#allocation2 + $0xe8] sm:$0xff] %v1087
    %1203 = vst [vmem:[#allocation2 + $0xf0] sm:$0xff] %v1089
    %1204 = vst [vmem:[#allocation2 + $0xf8] sm:$0xff] %v1091
    %1205 = vst [vmem:[#allocation2 + $0x100] sm:$0xff] %v1095
    %1206 = vst [vmem:[#allocation2 + $0x108] sm:$0xff] %v1097
    %1207 = vst [vmem:[#allocation2 + $0x110] sm:$0xff] %v1099
    %1208 = vst [vmem:[#allocation2 + $0x118] sm:$0xff] %v1101
    %1209 = vst [vmem:[#allocation2 + $0x120] sm:$0xff] %v1105
    %1210 = vst [vmem:[#allocation2 + $0x128] sm:$0xff] %v1107
    %1211 = vst [vmem:[#allocation2 + $0x130] sm:$0xff] %v1109
    %1212 = vst [vmem:[#allocation2 + $0x138] sm:$0xff] %v1111
    %1213 = vst [vmem:[#allocation2 + $0x140] sm:$0xff] %v1115
    %1214 = vst [vmem:[#allocation2 + $0x148] sm:$0xff] %v1117
    %1215 = vst [vmem:[#allocation2 + $0x150] sm:$0xff] %v1119
    %1216 = vst [vmem:[#allocation2 + $0x158] sm:$0xff] %v1121
    %1217 = vst [vmem:[#allocation2 + $0x160] sm:$0xff] %v1125
    %1218 = vst [vmem:[#allocation2 + $0x168] sm:$0xff] %v1127
    %1219 = vst [vmem:[#allocation2 + $0x170] sm:$0xff] %v1129
    %1220 = vst [vmem:[#allocation2 + $0x178] sm:$0xff] %v1131
    %1221 = vst [vmem:[#allocation2 + $0x180] sm:$0xff] %v1135
    %1222 = vst [vmem:[#allocation2 + $0x188] sm:$0xff] %v1137
    %1223 = vst [vmem:[#allocation2 + $0x190] sm:$0xff] %v1139
    %1224 = vst [vmem:[#allocation2 + $0x198] sm:$0xff] %v1141
    %1225 = vst [vmem:[#allocation2 + $0x1a0] sm:$0xff] %v1145
    %1226 = vst [vmem:[#allocation2 + $0x1a8] sm:$0xff] %v1147
    %1227 = vst [vmem:[#allocation2 + $0x1b0] sm:$0xff] %v1149
    %1228 = vst [vmem:[#allocation2 + $0x1b8] sm:$0xff] %v1151
    %1229 = vst [vmem:[#allocation2 + $0x1c0] sm:$0xff] %v1155
    %1230 = vst [vmem:[#allocation2 + $0x1c8] sm:$0xff] %v1157
    %1231 = vst [vmem:[#allocation2 + $0x1d0] sm:$0xff] %v1159
    %1232 = vst [vmem:[#allocation2 + $0x1d8] sm:$0xff] %v1161
    %1233 = vst [vmem:[#allocation2 + $0x1e0] sm:$0xff] %v1165
    %1234 = vst [vmem:[#allocation2 + $0x1e8] sm:$0xff] %v1167
    %1235 = vst [vmem:[#allocation2 + $0x1f0] sm:$0xff] %v1169
    %1236 = vst [vmem:[#allocation2 + $0x1f8] sm:$0xff] %v1171
    %v1237 = vmax.f32 %v1015, %v1017
    %1238 = vmax.xlane.f32.xlu0 %v1237
    %v1239 = vpop.xlane.xlu0 %1238
    %v1240 = vmax.f32 %v1019, %v1021
    %1241 = vmax.xlane.f32.xlu0 %v1240
    %v1242 = vpop.xlane.xlu0 %1241
    %v1243 = vmax.f32 %v1025, %v1027
    %1244 = vmax.xlane.f32.xlu0 %v1243
    %v1245 = vpop.xlane.xlu0 %1244
    %v1246 = vmax.f32 %v1029, %v1031
    %1247 = vmax.xlane.f32.xlu0 %v1246
    %v1248 = vpop.xlane.xlu0 %1247
    %v1249 = vmax.f32 %v1035, %v1037
    %1250 = vmax.xlane.f32.xlu0 %v1249
    %v1251 = vpop.xlane.xlu0 %1250
    %v1252 = vmax.f32 %v1039, %v1041
    %1253 = vmax.xlane.f32.xlu0 %v1252
    %v1254 = vpop.xlane.xlu0 %1253
    %v1255 = vmax.f32 %v1045, %v1047
    %1256 = vmax.xlane.f32.xlu0 %v1255
    %v1257 = vpop.xlane.xlu0 %1256
    %v1258 = vmax.f32 %v1049, %v1051
    %1259 = vmax.xlane.f32.xlu0 %v1258
    %v1260 = vpop.xlane.xlu0 %1259
    %v1261 = vmax.f32 %v1055, %v1057
    %1262 = vmax.xlane.f32.xlu0 %v1261
    %v1263 = vpop.xlane.xlu0 %1262
    %v1264 = vmax.f32 %v1059, %v1061
    %1265 = vmax.xlane.f32.xlu0 %v1264
    %v1266 = vpop.xlane.xlu0 %1265
    %v1267 = vmax.f32 %v1065, %v1067
    %1268 = vmax.xlane.f32.xlu0 %v1267
    %v1269 = vpop.xlane.xlu0 %1268
    %v1270 = vmax.f32 %v1069, %v1071
    %1271 = vmax.xlane.f32.xlu0 %v1270
    %v1272 = vpop.xlane.xlu0 %1271
    %v1273 = vmax.f32 %v1075, %v1077
    %1274 = vmax.xlane.f32.xlu0 %v1273
    %v1275 = vpop.xlane.xlu0 %1274
    %v1276 = vmax.f32 %v1079, %v1081
    %1277 = vmax.xlane.f32.xlu0 %v1276
    %v1278 = vpop.xlane.xlu0 %1277
    %v1279 = vmax.f32 %v1085, %v1087
    %1280 = vmax.xlane.f32.xlu0 %v1279
    %v1281 = vpop.xlane.xlu0 %1280
    %v1282 = vmax.f32 %v1089, %v1091
    %1283 = vmax.xlane.f32.xlu0 %v1282
    %v1284 = vpop.xlane.xlu0 %1283
    %v1285 = vmax.f32 %v1095, %v1097
    %1286 = vmax.xlane.f32.xlu0 %v1285
    %v1287 = vpop.xlane.xlu0 %1286
    %v1288 = vmax.f32 %v1099, %v1101
    %1289 = vmax.xlane.f32.xlu0 %v1288
    %v1290 = vpop.xlane.xlu0 %1289
    %v1291 = vmax.f32 %v1105, %v1107
    %1292 = vmax.xlane.f32.xlu0 %v1291
    %v1293 = vpop.xlane.xlu0 %1292
    %v1294 = vmax.f32 %v1109, %v1111
    %1295 = vmax.xlane.f32.xlu0 %v1294
    %v1296 = vpop.xlane.xlu0 %1295
    %v1297 = vmax.f32 %v1115, %v1117
    %1298 = vmax.xlane.f32.xlu0 %v1297
    %v1299 = vpop.xlane.xlu0 %1298
    %v1300 = vmax.f32 %v1119, %v1121
    %1301 = vmax.xlane.f32.xlu0 %v1300
    %v1302 = vpop.xlane.xlu0 %1301
    %v1303 = vmax.f32 %v1125, %v1127
    %1304 = vmax.xlane.f32.xlu0 %v1303
    %v1305 = vpop.xlane.xlu0 %1304
    %v1306 = vmax.f32 %v1129, %v1131
    %1307 = vmax.xlane.f32.xlu0 %v1306
    %v1308 = vpop.xlane.xlu0 %1307
    %v1309 = vmax.f32 %v1135, %v1137
    %1310 = vmax.xlane.f32.xlu0 %v1309
    %v1311 = vpop.xlane.xlu0 %1310
    %v1312 = vmax.f32 %v1139, %v1141
    %1313 = vmax.xlane.f32.xlu0 %v1312
    %v1314 = vpop.xlane.xlu0 %1313
    %v1315 = vmax.f32 %v1145, %v1147
    %1316 = vmax.xlane.f32.xlu0 %v1315
    %v1317 = vpop.xlane.xlu0 %1316
    %v1318 = vmax.f32 %v1149, %v1151
    %1319 = vmax.xlane.f32.xlu0 %v1318
    %v1320 = vpop.xlane.xlu0 %1319
    %v1321 = vmax.f32 %v1155, %v1157
    %1322 = vmax.xlane.f32.xlu0 %v1321
    %v1323 = vpop.xlane.xlu0 %1322
    %v1324 = vmax.f32 %v1159, %v1161
    %1325 = vmax.xlane.f32.xlu0 %v1324
    %v1326 = vpop.xlane.xlu0 %1325
    %v1327 = vmax.f32 %v1165, %v1167
    %1328 = vmax.xlane.f32.xlu0 %v1327
    %v1329 = vpop.xlane.xlu0 %1328
    %v1330 = vmax.f32 %v1169, %v1171
    %1331 = vmax.xlane.f32.xlu0 %v1330
    %v1332 = vpop.xlane.xlu0 %1331
    %v1333 = vsub.f32 %v1015, %v1239
    %v1334 = vsub.f32 %v1017, %v1239
    %v1335 = vsub.f32 %v1019, %v1242
    %v1336 = vsub.f32 %v1021, %v1242
    %v1337 = vsub.f32 %v1025, %v1245
    %v1338 = vsub.f32 %v1027, %v1245
    %v1339 = vsub.f32 %v1029, %v1248
    %v1340 = vsub.f32 %v1031, %v1248
    %v1341 = vsub.f32 %v1035, %v1251
    %v1342 = vsub.f32 %v1037, %v1251
    %v1343 = vsub.f32 %v1039, %v1254
    %v1344 = vsub.f32 %v1041, %v1254
    %v1345 = vsub.f32 %v1045, %v1257
    %v1346 = vsub.f32 %v1047, %v1257
    %v1347 = vsub.f32 %v1049, %v1260
    %v1348 = vsub.f32 %v1051, %v1260
    %v1349 = vsub.f32 %v1055, %v1263
    %v1350 = vsub.f32 %v1057, %v1263
    %v1351 = vsub.f32 %v1059, %v1266
    %v1352 = vsub.f32 %v1061, %v1266
    %v1353 = vsub.f32 %v1065, %v1269
    %v1354 = vsub.f32 %v1067, %v1269
    %v1355 = vsub.f32 %v1069, %v1272
    %v1356 = vsub.f32 %v1071, %v1272
    %v1357 = vsub.f32 %v1075, %v1275
    %v1358 = vsub.f32 %v1077, %v1275
    %v1359 = vsub.f32 %v1079, %v1278
    %v1360 = vsub.f32 %v1081, %v1278
    %v1361 = vsub.f32 %v1085, %v1281
    %v1362 = vsub.f32 %v1087, %v1281
    %v1363 = vsub.f32 %v1089, %v1284
    %v1364 = vsub.f32 %v1091, %v1284
    %v1365 = vsub.f32 %v1095, %v1287
    %v1366 = vsub.f32 %v1097, %v1287
    %v1367 = vsub.f32 %v1099, %v1290
    %v1368 = vsub.f32 %v1101, %v1290
    %v1369 = vsub.f32 %v1105, %v1293
    %v1370 = vsub.f32 %v1107, %v1293
    %v1371 = vsub.f32 %v1109, %v1296
    %v1372 = vsub.f32 %v1111, %v1296
    %v1373 = vsub.f32 %v1115, %v1299
    %v1374 = vsub.f32 %v1117, %v1299
    %v1375 = vsub.f32 %v1119, %v1302
    %v1376 = vsub.f32 %v1121, %v1302
    %v1377 = vsub.f32 %v1125, %v1305
    %v1378 = vsub.f32 %v1127, %v1305
    %v1379 = vsub.f32 %v1129, %v1308
    %v1380 = vsub.f32 %v1131, %v1308
    %v1381 = vsub.f32 %v1135, %v1311
    %v1382 = vsub.f32 %v1137, %v1311
    %v1383 = vsub.f32 %v1139, %v1314
    %v1384 = vsub.f32 %v1141, %v1314
    %v1385 = vsub.f32 %v1145, %v1317
    %v1386 = vsub.f32 %v1147, %v1317
    %v1387 = vsub.f32 %v1149, %v1320
    %v1388 = vsub.f32 %v1151, %v1320
    %v1389 = vsub.f32 %v1155, %v1323
    %v1390 = vsub.f32 %v1157, %v1323
    %v1391 = vsub.f32 %v1159, %v1326
    %v1392 = vsub.f32 %v1161, %v1326
    %v1393 = vsub.f32 %v1165, %v1329
    %v1394 = vsub.f32 %v1167, %v1329
    %v1395 = vsub.f32 %v1169, %v1332
    %v1396 = vsub.f32 %v1171, %v1332
    %v1397 = vmul.f32 %v1333, 1.442695
    %v1398 = vpow.pop %v1397
    %v1399 = vmul.f32 %v1334, 1.442695
    %v1400 = vpow.pop %v1399
    %v1401 = vmul.f32 %v1335, 1.442695
    %v1402 = vpow.pop %v1401
    %v1403 = vmul.f32 %v1336, 1.442695
    %v1404 = vpow.pop %v1403
    %v1405 = vmul.f32 %v1337, 1.442695
    %v1406 = vpow.pop %v1405
    %v1407 = vmul.f32 %v1338, 1.442695
    %v1408 = vpow.pop %v1407
    %v1409 = vmul.f32 %v1339, 1.442695
    %v1410 = vpow.pop %v1409
    %v1411 = vmul.f32 %v1340, 1.442695
    %v1412 = vpow.pop %v1411
    %v1413 = vmul.f32 %v1341, 1.442695
    %v1414 = vpow.pop %v1413
    %v1415 = vmul.f32 %v1342, 1.442695
    %v1416 = vpow.pop %v1415
    %v1417 = vmul.f32 %v1343, 1.442695
    %v1418 = vpow.pop %v1417
    %v1419 = vmul.f32 %v1344, 1.442695
    %v1420 = vpow.pop %v1419
    %v1421 = vmul.f32 %v1345, 1.442695
    %v1422 = vpow.pop %v1421
    %v1423 = vmul.f32 %v1346, 1.442695
    %v1424 = vpow.pop %v1423
    %v1425 = vmul.f32 %v1347, 1.442695
    %v1426 = vpow.pop %v1425
    %v1427 = vmul.f32 %v1348, 1.442695
    %v1428 = vpow.pop %v1427
    %v1429 = vmul.f32 %v1349, 1.442695
    %v1430 = vpow.pop %v1429
    %v1431 = vmul.f32 %v1350, 1.442695
    %v1432 = vpow.pop %v1431
    %v1433 = vmul.f32 %v1351, 1.442695
    %v1434 = vpow.pop %v1433
    %v1435 = vmul.f32 %v1352, 1.442695
    %v1436 = vpow.pop %v1435
    %v1437 = vmul.f32 %v1353, 1.442695
    %v1438 = vpow.pop %v1437
    %v1439 = vmul.f32 %v1354, 1.442695
    %v1440 = vpow.pop %v1439
    %v1441 = vmul.f32 %v1355, 1.442695
    %v1442 = vpow.pop %v1441
    %v1443 = vmul.f32 %v1356, 1.442695
    %v1444 = vpow.pop %v1443
    %v1445 = vmul.f32 %v1357, 1.442695
    %v1446 = vpow.pop %v1445
    %v1447 = vmul.f32 %v1358, 1.442695
    %v1448 = vpow.pop %v1447
    %v1449 = vmul.f32 %v1359, 1.442695
    %v1450 = vpow.pop %v1449
    %v1451 = vmul.f32 %v1360, 1.442695
    %v1452 = vpow.pop %v1451
    %v1453 = vmul.f32 %v1361, 1.442695
    %v1454 = vpow.pop %v1453
    %v1455 = vmul.f32 %v1362, 1.442695
    %v1456 = vpow.pop %v1455
    %v1457 = vmul.f32 %v1363, 1.442695
    %v1458 = vpow.pop %v1457
    %v1459 = vmul.f32 %v1364, 1.442695
    %v1460 = vpow.pop %v1459
    %v1461 = vmul.f32 %v1365, 1.442695
    %v1462 = vpow.pop %v1461
    %v1463 = vmul.f32 %v1366, 1.442695
    %v1464 = vpow.pop %v1463
    %v1465 = vmul.f32 %v1367, 1.442695
    %v1466 = vpow.pop %v1465
    %v1467 = vmul.f32 %v1368, 1.442695
    %v1468 = vpow.pop %v1467
    %v1469 = vmul.f32 %v1369, 1.442695
    %v1470 = vpow.pop %v1469
    %v1471 = vmul.f32 %v1370, 1.442695
    %v1472 = vpow.pop %v1471
    %v1473 = vmul.f32 %v1371, 1.442695
    %v1474 = vpow.pop %v1473
    %v1475 = vmul.f32 %v1372, 1.442695
    %v1476 = vpow.pop %v1475
    %v1477 = vmul.f32 %v1373, 1.442695
    %v1478 = vpow.pop %v1477
    %v1479 = vmul.f32 %v1374, 1.442695
    %v1480 = vpow.pop %v1479
    %v1481 = vmul.f32 %v1375, 1.442695
    %v1482 = vpow.pop %v1481
    %v1483 = vmul.f32 %v1376, 1.442695
    %v1484 = vpow.pop %v1483
    %v1485 = vmul.f32 %v1377, 1.442695
    %v1486 = vpow.pop %v1485
    %v1487 = vmul.f32 %v1378, 1.442695
    %v1488 = vpow.pop %v1487
    %v1489 = vmul.f32 %v1379, 1.442695
    %v1490 = vpow.pop %v1489
    %v1491 = vmul.f32 %v1380, 1.442695
    %v1492 = vpow.pop %v1491
    %v1493 = vmul.f32 %v1381, 1.442695
    %v1494 = vpow.pop %v1493
    %v1495 = vmul.f32 %v1382, 1.442695
    %v1496 = vpow.pop %v1495
    %v1497 = vmul.f32 %v1383, 1.442695
    %v1498 = vpow.pop %v1497
    %v1499 = vmul.f32 %v1384, 1.442695
    %v1500 = vpow.pop %v1499
    %v1501 = vmul.f32 %v1385, 1.442695
    %v1502 = vpow.pop %v1501
    %v1503 = vmul.f32 %v1386, 1.442695
    %v1504 = vpow.pop %v1503
    %v1505 = vmul.f32 %v1387, 1.442695
    %v1506 = vpow.pop %v1505
    %v1507 = vmul.f32 %v1388, 1.442695
    %v1508 = vpow.pop %v1507
    %v1509 = vmul.f32 %v1389, 1.442695
    %v1510 = vpow.pop %v1509
    %v1511 = vmul.f32 %v1390, 1.442695
    %v1512 = vpow.pop %v1511
    %v1513 = vmul.f32 %v1391, 1.442695
    %v1514 = vpow.pop %v1513
    %v1515 = vmul.f32 %v1392, 1.442695
    %v1516 = vpow.pop %v1515
    %v1517 = vmul.f32 %v1393, 1.442695
    %v1518 = vpow.pop %v1517
    %v1519 = vmul.f32 %v1394, 1.442695
    %v1520 = vpow.pop %v1519
    %v1521 = vmul.f32 %v1395, 1.442695
    %v1522 = vpow.pop %v1521
    %v1523 = vmul.f32 %v1396, 1.442695
    %v1524 = vpow.pop %v1523
    %v1525 = vadd.f32 %v1398, %v1400
    %1526 = vadd.xlane.f32.xlu0 %v1525
    %v1527 = vpop.xlane.xlu0 %1526
    %v1528 = vadd.f32 %v1402, %v1404
    %1529 = vadd.xlane.f32.xlu0 %v1528
    %v1530 = vpop.xlane.xlu0 %1529
    %v1531 = vadd.f32 %v1406, %v1408
    %1532 = vadd.xlane.f32.xlu0 %v1531
    %v1533 = vpop.xlane.xlu0 %1532
    %v1534 = vadd.f32 %v1410, %v1412
    %1535 = vadd.xlane.f32.xlu0 %v1534
    %v1536 = vpop.xlane.xlu0 %1535
    %v1537 = vadd.f32 %v1414, %v1416
    %1538 = vadd.xlane.f32.xlu0 %v1537
    %v1539 = vpop.xlane.xlu0 %1538
    %v1540 = vadd.f32 %v1418, %v1420
    %1541 = vadd.xlane.f32.xlu0 %v1540
    %v1542 = vpop.xlane.xlu0 %1541
    %v1543 = vadd.f32 %v1422, %v1424
    %1544 = vadd.xlane.f32.xlu0 %v1543
    %v1545 = vpop.xlane.xlu0 %1544
    %v1546 = vadd.f32 %v1426, %v1428
    %1547 = vadd.xlane.f32.xlu0 %v1546
    %v1548 = vpop.xlane.xlu0 %1547
    %v1549 = vadd.f32 %v1430, %v1432
    %1550 = vadd.xlane.f32.xlu0 %v1549
    %v1551 = vpop.xlane.xlu0 %1550
    %v1552 = vadd.f32 %v1434, %v1436
    %1553 = vadd.xlane.f32.xlu0 %v1552
    %v1554 = vpop.xlane.xlu0 %1553
    %v1555 = vadd.f32 %v1438, %v1440
    %1556 = vadd.xlane.f32.xlu0 %v1555
    %v1557 = vpop.xlane.xlu0 %1556
    %v1558 = vadd.f32 %v1442, %v1444
    %1559 = vadd.xlane.f32.xlu0 %v1558
    %v1560 = vpop.xlane.xlu0 %1559
    %v1561 = vadd.f32 %v1446, %v1448
    %1562 = vadd.xlane.f32.xlu0 %v1561
    %v1563 = vpop.xlane.xlu0 %1562
    %v1564 = vadd.f32 %v1450, %v1452
    %1565 = vadd.xlane.f32.xlu0 %v1564
    %v1566 = vpop.xlane.xlu0 %1565
    %v1567 = vadd.f32 %v1454, %v1456
    %1568 = vadd.xlane.f32.xlu0 %v1567
    %v1569 = vpop.xlane.xlu0 %1568
    %v1570 = vadd.f32 %v1458, %v1460
    %1571 = vadd.xlane.f32.xlu0 %v1570
    %v1572 = vpop.xlane.xlu0 %1571
    %v1573 = vadd.f32 %v1462, %v1464
    %1574 = vadd.xlane.f32.xlu0 %v1573
    %v1575 = vpop.xlane.xlu0 %1574
    %v1576 = vadd.f32 %v1466, %v1468
    %1577 = vadd.xlane.f32.xlu0 %v1576
    %v1578 = vpop.xlane.xlu0 %1577
    %v1579 = vadd.f32 %v1470, %v1472
    %1580 = vadd.xlane.f32.xlu0 %v1579
    %v1581 = vpop.xlane.xlu0 %1580
    %v1582 = vadd.f32 %v1474, %v1476
    %1583 = vadd.xlane.f32.xlu0 %v1582
    %v1584 = vpop.xlane.xlu0 %1583
    %v1585 = vadd.f32 %v1478, %v1480
    %1586 = vadd.xlane.f32.xlu0 %v1585
    %v1587 = vpop.xlane.xlu0 %1586
    %v1588 = vadd.f32 %v1482, %v1484
    %1589 = vadd.xlane.f32.xlu0 %v1588
    %v1590 = vpop.xlane.xlu0 %1589
    %v1591 = vadd.f32 %v1486, %v1488
    %1592 = vadd.xlane.f32.xlu0 %v1591
    %v1593 = vpop.xlane.xlu0 %1592
    %v1594 = vadd.f32 %v1490, %v1492
    %1595 = vadd.xlane.f32.xlu0 %v1594
    %v1596 = vpop.xlane.xlu0 %1595
    %v1597 = vadd.f32 %v1494, %v1496
    %1598 = vadd.xlane.f32.xlu0 %v1597
    %v1599 = vpop.xlane.xlu0 %1598
    %v1600 = vadd.f32 %v1498, %v1500
    %1601 = vadd.xlane.f32.xlu0 %v1600
    %v1602 = vpop.xlane.xlu0 %1601
    %v1603 = vadd.f32 %v1502, %v1504
    %1604 = vadd.xlane.f32.xlu0 %v1603
    %v1605 = vpop.xlane.xlu0 %1604
    %v1606 = vadd.f32 %v1506, %v1508
    %1607 = vadd.xlane.f32.xlu0 %v1606
    %v1608 = vpop.xlane.xlu0 %1607
    %v1609 = vadd.f32 %v1510, %v1512
    %1610 = vadd.xlane.f32.xlu0 %v1609
    %v1611 = vpop.xlane.xlu0 %1610
    %v1612 = vadd.f32 %v1514, %v1516
    %1613 = vadd.xlane.f32.xlu0 %v1612
    %v1614 = vpop.xlane.xlu0 %1613
    %v1615 = vadd.f32 %v1518, %v1520
    %1616 = vadd.xlane.f32.xlu0 %v1615
    %v1617 = vpop.xlane.xlu0 %1616
    %v1618 = vadd.f32 %v1522, %v1524
    %1619 = vadd.xlane.f32.xlu0 %v1618
    %v1620 = vpop.xlane.xlu0 %1619
    %v1621 = vrcp.pop %v1527
    %v1622 = vrcp.pop %v1530
    %v1623 = vrcp.pop %v1533
    %v1624 = vrcp.pop %v1536
    %v1625 = vrcp.pop %v1539
    %v1626 = vrcp.pop %v1542
    %v1627 = vrcp.pop %v1545
    %v1628 = vrcp.pop %v1548
    %v1629 = vrcp.pop %v1551
    %v1630 = vrcp.pop %v1554
    %v1631 = vrcp.pop %v1557
    %v1632 = vrcp.pop %v1560
    %v1633 = vrcp.pop %v1563
    %v1634 = vrcp.pop %v1566
    %v1635 = vrcp.pop %v1569
    %v1636 = vrcp.pop %v1572
    %v1637 = vrcp.pop %v1575
    %v1638 = vrcp.pop %v1578
    %v1639 = vrcp.pop %v1581
    %v1640 = vrcp.pop %v1584
    %v1641 = vrcp.pop %v1587
    %v1642 = vrcp.pop %v1590
    %v1643 = vrcp.pop %v1593
    %v1644 = vrcp.pop %v1596
    %v1645 = vrcp.pop %v1599
    %v1646 = vrcp.pop %v1602
    %v1647 = vrcp.pop %v1605
    %v1648 = vrcp.pop %v1608
    %v1649 = vrcp.pop %v1611
    %v1650 = vrcp.pop %v1614
    %v1651 = vrcp.pop %v1617
    %v1652 = vrcp.pop %v1620
    %v1653 = vmul.f32 %v1398, %v1621
    %v1654 = vmul.f32 %v1400, %v1621
    %v1655 = vmul.f32 %v1402, %v1622
    %v1656 = vmul.f32 %v1404, %v1622
    %v1657 = vmul.f32 %v1406, %v1623
    %v1658 = vmul.f32 %v1408, %v1623
    %v1659 = vmul.f32 %v1410, %v1624
    %v1660 = vmul.f32 %v1412, %v1624
    %v1661 = vmul.f32 %v1414, %v1625
    %v1662 = vmul.f32 %v1416, %v1625
    %v1663 = vmul.f32 %v1418, %v1626
    %v1664 = vmul.f32 %v1420, %v1626
    %v1665 = vmul.f32 %v1422, %v1627
    %v1666 = vmul.f32 %v1424, %v1627
    %v1667 = vmul.f32 %v1426, %v1628
    %v1668 = vmul.f32 %v1428, %v1628
    %v1669 = vmul.f32 %v1430, %v1629
    %v1670 = vmul.f32 %v1432, %v1629
    %v1671 = vmul.f32 %v1434, %v1630
    %v1672 = vmul.f32 %v1436, %v1630
    %v1673 = vmul.f32 %v1438, %v1631
    %v1674 = vmul.f32 %v1440, %v1631
    %v1675 = vmul.f32 %v1442, %v1632
    %v1676 = vmul.f32 %v1444, %v1632
    %v1677 = vmul.f32 %v1446, %v1633
    %v1678 = vmul.f32 %v1448, %v1633
    %v1679 = vmul.f32 %v1450, %v1634
    %v1680 = vmul.f32 %v1452, %v1634
    %v1681 = vmul.f32 %v1454, %v1635
    %v1682 = vmul.f32 %v1456, %v1635
    %v1683 = vmul.f32 %v1458, %v1636
    %v1684 = vmul.f32 %v1460, %v1636
    %v1685 = vmul.f32 %v1462, %v1637
    %v1686 = vmul.f32 %v1464, %v1637
    %v1687 = vmul.f32 %v1466, %v1638
    %v1688 = vmul.f32 %v1468, %v1638
    %v1689 = vmul.f32 %v1470, %v1639
    %v1690 = vmul.f32 %v1472, %v1639
    %v1691 = vmul.f32 %v1474, %v1640
    %v1692 = vmul.f32 %v1476, %v1640
    %v1693 = vmul.f32 %v1478, %v1641
    %v1694 = vmul.f32 %v1480, %v1641
    %v1695 = vmul.f32 %v1482, %v1642
    %v1696 = vmul.f32 %v1484, %v1642
    %v1697 = vmul.f32 %v1486, %v1643
    %v1698 = vmul.f32 %v1488, %v1643
    %v1699 = vmul.f32 %v1490, %v1644
    %v1700 = vmul.f32 %v1492, %v1644
    %v1701 = vmul.f32 %v1494, %v1645
    %v1702 = vmul.f32 %v1496, %v1645
    %v1703 = vmul.f32 %v1498, %v1646
    %v1704 = vmul.f32 %v1500, %v1646
    %v1705 = vmul.f32 %v1502, %v1647
    %v1706 = vmul.f32 %v1504, %v1647
    %v1707 = vmul.f32 %v1506, %v1648
    %v1708 = vmul.f32 %v1508, %v1648
    %v1709 = vmul.f32 %v1510, %v1649
    %v1710 = vmul.f32 %v1512, %v1649
    %v1711 = vmul.f32 %v1514, %v1650
    %v1712 = vmul.f32 %v1516, %v1650
    %v1713 = vmul.f32 %v1518, %v1651
    %v1714 = vmul.f32 %v1520, %v1651
    %v1715 = vmul.f32 %v1522, %v1652
    %v1716 = vmul.f32 %v1524, %v1652
    %v1717 = vpack.c.bf16 %v1655, %v1653
    %v1718 = vpack.c.bf16 %v1656, %v1654
    %v1719 = vpack.c.bf16 %v1659, %v1657
    %v1720 = vpack.c.bf16 %v1660, %v1658
    %v1721 = vpack.c.bf16 %v1663, %v1661
    %v1722 = vpack.c.bf16 %v1664, %v1662
    %v1723 = vpack.c.bf16 %v1667, %v1665
    %v1724 = vpack.c.bf16 %v1668, %v1666
    %v1725 = vpack.c.bf16 %v1671, %v1669
    %v1726 = vpack.c.bf16 %v1672, %v1670
    %v1727 = vpack.c.bf16 %v1675, %v1673
    %v1728 = vpack.c.bf16 %v1676, %v1674
    %v1729 = vpack.c.bf16 %v1679, %v1677
    %v1730 = vpack.c.bf16 %v1680, %v1678
    %v1731 = vpack.c.bf16 %v1683, %v1681
    %v1732 = vpack.c.bf16 %v1684, %v1682
    %v1733 = vpack.c.bf16 %v1687, %v1685
    %v1734 = vpack.c.bf16 %v1688, %v1686
    %v1735 = vpack.c.bf16 %v1691, %v1689
    %v1736 = vpack.c.bf16 %v1692, %v1690
    %v1737 = vpack.c.bf16 %v1695, %v1693
    %v1738 = vpack.c.bf16 %v1696, %v1694
    %v1739 = vpack.c.bf16 %v1699, %v1697
    %v1740 = vpack.c.bf16 %v1700, %v1698
    %v1741 = vpack.c.bf16 %v1703, %v1701
    %v1742 = vpack.c.bf16 %v1704, %v1702
    %v1743 = vpack.c.bf16 %v1707, %v1705
    %v1744 = vpack.c.bf16 %v1708, %v1706
    %v1745 = vpack.c.bf16 %v1711, %v1709
    %v1746 = vpack.c.bf16 %v1712, %v1710
    %v1747 = vpack.c.bf16 %v1715, %v1713
    %v1748 = vpack.c.bf16 %v1716, %v1714
    %v1781 = vunpack.c.l.b16 %v1717
    %v1782 = vunpack.c.l.b16 %v1718
    %v1783 = vunpack.c.h.b16 %v1717
    %v1784 = vunpack.c.h.b16 %v1718
    %v1785 = vunpack.c.l.b16 %v1719
    %v1786 = vunpack.c.l.b16 %v1720
    %v1787 = vunpack.c.h.b16 %v1719
    %v1788 = vunpack.c.h.b16 %v1720
    %v1789 = vunpack.c.l.b16 %v1721
    %v1790 = vunpack.c.l.b16 %v1722
    %v1791 = vunpack.c.h.b16 %v1721
    %v1792 = vunpack.c.h.b16 %v1722
    %v1793 = vunpack.c.l.b16 %v1723
    %v1794 = vunpack.c.l.b16 %v1724
    %v1795 = vunpack.c.h.b16 %v1723
    %v1796 = vunpack.c.h.b16 %v1724
    %v1797 = vunpack.c.l.b16 %v1725
    %v1798 = vunpack.c.l.b16 %v1726
    %v1799 = vunpack.c.h.b16 %v1725
    %v1800 = vunpack.c.h.b16 %v1726
    %v1801 = vunpack.c.l.b16 %v1727
    %v1802 = vunpack.c.l.b16 %v1728
    %v1803 = vunpack.c.h.b16 %v1727
    %v1804 = vunpack.c.h.b16 %v1728
    %v1805 = vunpack.c.l.b16 %v1729
    %v1806 = vunpack.c.l.b16 %v1730
    %v1807 = vunpack.c.h.b16 %v1729
    %v1808 = vunpack.c.h.b16 %v1730
    %v1809 = vunpack.c.l.b16 %v1731
    %v1810 = vunpack.c.l.b16 %v1732
    %v1811 = vunpack.c.h.b16 %v1731
    %v1812 = vunpack.c.h.b16 %v1732
    %v1813 = vunpack.c.l.b16 %v1733
    %v1814 = vunpack.c.l.b16 %v1734
    %v1815 = vunpack.c.h.b16 %v1733
    %v1816 = vunpack.c.h.b16 %v1734
    %v1817 = vunpack.c.l.b16 %v1735
    %v1818 = vunpack.c.l.b16 %v1736
    %v1819 = vunpack.c.h.b16 %v1735
    %v1820 = vunpack.c.h.b16 %v1736
    %v1821 = vunpack.c.l.b16 %v1737
    %v1822 = vunpack.c.l.b16 %v1738
    %v1823 = vunpack.c.h.b16 %v1737
    %v1824 = vunpack.c.h.b16 %v1738
    %v1825 = vunpack.c.l.b16 %v1739
    %v1826 = vunpack.c.l.b16 %v1740
    %v1827 = vunpack.c.h.b16 %v1739
    %v1828 = vunpack.c.h.b16 %v1740
    %v1829 = vunpack.c.l.b16 %v1741
    %v1830 = vunpack.c.l.b16 %v1742
    %v1831 = vunpack.c.h.b16 %v1741
    %v1832 = vunpack.c.h.b16 %v1742
    %v1833 = vunpack.c.l.b16 %v1743
    %v1834 = vunpack.c.l.b16 %v1744
    %v1835 = vunpack.c.h.b16 %v1743
    %v1836 = vunpack.c.h.b16 %v1744
    %v1837 = vunpack.c.l.b16 %v1745
    %v1838 = vunpack.c.l.b16 %v1746
    %v1839 = vunpack.c.h.b16 %v1745
    %v1840 = vunpack.c.h.b16 %v1746
    %v1841 = vunpack.c.l.b16 %v1747
    %v1842 = vunpack.c.l.b16 %v1748
    %v1843 = vunpack.c.h.b16 %v1747
    %v1844 = vunpack.c.h.b16 %v1748
    %v1845 = vpack.c.b16 %v1782, %v1781
    %v1846 = vpack.c.b16 %v1784, %v1783
    %v1847 = vpack.c.b16 %v1786, %v1785
    %v1848 = vpack.c.b16 %v1788, %v1787
    %v1849 = vpack.c.b16 %v1790, %v1789
    %v1850 = vpack.c.b16 %v1792, %v1791
    %v1851 = vpack.c.b16 %v1794, %v1793
    %v1852 = vpack.c.b16 %v1796, %v1795
    %v1853 = vpack.c.b16 %v1798, %v1797
    %v1854 = vpack.c.b16 %v1800, %v1799
    %v1855 = vpack.c.b16 %v1802, %v1801
    %v1856 = vpack.c.b16 %v1804, %v1803
    %v1857 = vpack.c.b16 %v1806, %v1805
    %v1858 = vpack.c.b16 %v1808, %v1807
    %v1859 = vpack.c.b16 %v1810, %v1809
    %v1860 = vpack.c.b16 %v1812, %v1811
    %v1861 = vpack.c.b16 %v1814, %v1813
    %v1862 = vpack.c.b16 %v1816, %v1815
    %v1863 = vpack.c.b16 %v1818, %v1817
    %v1864 = vpack.c.b16 %v1820, %v1819
    %v1865 = vpack.c.b16 %v1822, %v1821
    %v1866 = vpack.c.b16 %v1824, %v1823
    %v1867 = vpack.c.b16 %v1826, %v1825
    %v1868 = vpack.c.b16 %v1828, %v1827
    %v1869 = vpack.c.b16 %v1830, %v1829
    %v1870 = vpack.c.b16 %v1832, %v1831
    %v1871 = vpack.c.b16 %v1834, %v1833
    %v1872 = vpack.c.b16 %v1836, %v1835
    %v1873 = vpack.c.b16 %v1838, %v1837
    %v1874 = vpack.c.b16 %v1840, %v1839
    %v1875 = vpack.c.b16 %v1842, %v1841
    %v1876 = vpack.c.b16 %v1844, %v1843
    %1909 = vst [vmem:[#allocation4] sm:$0xff] %v1845
    %1910 = vst [vmem:[#allocation4 + $0x8] sm:$0xff] %v1846
    %1911 = vst [vmem:[#allocation4 + $0x10] sm:$0xff] %v1847
    %1912 = vst [vmem:[#allocation4 + $0x18] sm:$0xff] %v1848
    %1913 = vst [vmem:[#allocation4 + $0x20] sm:$0xff] %v1849
    %1914 = vst [vmem:[#allocation4 + $0x28] sm:$0xff] %v1850
    %1915 = vst [vmem:[#allocation4 + $0x30] sm:$0xff] %v1851
    %1916 = vst [vmem:[#allocation4 + $0x38] sm:$0xff] %v1852
    %1917 = vst [vmem:[#allocation4 + $0x40] sm:$0xff] %v1853
    %1918 = vst [vmem:[#allocation4 + $0x48] sm:$0xff] %v1854
    %1919 = vst [vmem:[#allocation4 + $0x50] sm:$0xff] %v1855
    %1920 = vst [vmem:[#allocation4 + $0x58] sm:$0xff] %v1856
    %1921 = vst [vmem:[#allocation4 + $0x60] sm:$0xff] %v1857
    %1922 = vst [vmem:[#allocation4 + $0x68] sm:$0xff] %v1858
    %1923 = vst [vmem:[#allocation4 + $0x70] sm:$0xff] %v1859
    %1924 = vst [vmem:[#allocation4 + $0x78] sm:$0xff] %v1860
    %1925 = vst [vmem:[#allocation4 + $0x80] sm:$0xff] %v1861
    %1926 = vst [vmem:[#allocation4 + $0x88] sm:$0xff] %v1862
    %1927 = vst [vmem:[#allocation4 + $0x90] sm:$0xff] %v1863
    %1928 = vst [vmem:[#allocation4 + $0x98] sm:$0xff] %v1864
    %1929 = vst [vmem:[#allocation4 + $0xa0] sm:$0xff] %v1865
    %1930 = vst [vmem:[#allocation4 + $0xa8] sm:$0xff] %v1866
    %1931 = vst [vmem:[#allocation4 + $0xb0] sm:$0xff] %v1867
    %1932 = vst [vmem:[#allocation4 + $0xb8] sm:$0xff] %v1868
    %1933 = vst [vmem:[#allocation4 + $0xc0] sm:$0xff] %v1869
    %1934 = vst [vmem:[#allocation4 + $0xc8] sm:$0xff] %v1870
    %1935 = vst [vmem:[#allocation4 + $0xd0] sm:$0xff] %v1871
    %1936 = vst [vmem:[#allocation4 + $0xd8] sm:$0xff] %v1872
    %1937 = vst [vmem:[#allocation4 + $0xe0] sm:$0xff] %v1873
    %1938 = vst [vmem:[#allocation4 + $0xe8] sm:$0xff] %v1874
    %1939 = vst [vmem:[#allocation4 + $0xf0] sm:$0xff] %v1875
    %1940 = vst [vmem:[#allocation4 + $0xf8] sm:$0xff] %v1876
    // Predicated region
    $region18: #{cnn_text_summarization_forward.1} parent=1 // pred_check
      _
    $region19: #{cnn_text_summarization_forward.1} parent=1 // pred_check_branch
      %1942 = sbr.rel (0) target = $region21
    $region20: #{cnn_text_summarization_forward.1} parent=1 // pred_region
      %s1944 = ssub.s32 8192, 8192
      %1945 = vsyncadd [#allocation3], %s1944
      %s1946 = sshll.u32 [#allocation2], 4
      %s1947 = int_to_ptr.vmem [resolvable:$true] %s1946
      %1952 = dma.vmem_to_hbm [thread:$0]  %s1947, 8192, %s4, [#allocation3], 256, 256, 16
    $region21: #{cnn_text_summarization_forward.1} parent=1 // pred_fallthru
      _
    // Predicated region
    $region22: #{cnn_text_summarization_forward.1} parent=1 // pred_check
      _
    $region23: #{cnn_text_summarization_forward.1} parent=1 // pred_check_branch
      %1954 = sbr.rel (0) target = $region25
    $region24: #{cnn_text_summarization_forward.1} parent=1 // pred_region
      %s1956 = ssub.s32 4096, 4096
      %1957 = vsyncadd [#allocation5], %s1956
      %s1958 = sshll.u32 [#allocation4], 4
      %s1959 = int_to_ptr.vmem [resolvable:$true] %s1958
      %1964 = dma.vmem_to_hbm [thread:$0]  %s1959, 4096, %s5, [#allocation5], 128, 128, 8
    $region25: #{cnn_text_summarization_forward.1} parent=1 // pred_fallthru
      _
    // Predicated region
    $region26: #{cnn_text_summarization_forward.1} parent=1 // pred_check
      _
    $region27: #{cnn_text_summarization_forward.1} parent=1 // pred_check_branch
      %1966 = sbr.rel (0) target = $region29
    $region28: #{cnn_text_summarization_forward.1} parent=1 // pred_region
      %1967 = dma.done [#allocation3], 8192
    $region29: #{cnn_text_summarization_forward.1} parent=1 // pred_fallthru
      _
    // Predicated region
    $region30: #{cnn_text_summarization_forward.1} parent=1 // pred_check
      _
    $region31: #{cnn_text_summarization_forward.1} parent=1 // pred_check_branch
      %1969 = sbr.rel (0) target = $region33
    $region32: #{cnn_text_summarization_forward.1} parent=1 // pred_region
      %1970 = dma.done [#allocation5], 4096
    $region33: #{cnn_text_summarization_forward.1} parent=1 // pred_fallthru
      _
    %1971 = vsyncpa [#allocation3], 1
    %1972 = vsyncpa [#allocation5], 1

</llo_original>
